<compile_context>
chip_gen: v5e
topology: v5e:2x2
jax: 0.10.0
libtpu: 0.0.40
codegen_flags: <defaults>
</compile_context>

<pallas_src>
import jax
import jax.numpy as jnp
from jax.experimental import pallas as pl
from jax.experimental.pallas import tpu as pltpu

EPS = 1e-5  # PyTorch nn.LayerNorm default eps

LAYER_ORDER = [
    "st_enc1_cont", "st_enc2_cont", "st_enc1_style", "st_enc2_style",
    "sc_enc2_cont", "sc_enc1_cont", "enc_style2", "enc_style1",
    "st_dec2", "st_dec1",
]

ENC_NAMES = ["st_cont1", "st_cont2", "sc_cont1", "sc_cont2",
             "st_style1", "st_style2", "fake_style1", "fake_style2"]


def _round_up(x, m):
    return ((x + m - 1) // m) * m


# ----------------------------------------------------------------------------
# In-kernel helpers
# ----------------------------------------------------------------------------
def _linear(x, w_ref, b_ref):
    return jnp.dot(x, w_ref[...], preferred_element_type=jnp.float32) + b_ref[...]


def _ln_relu(z, g_ref, t_ref):
    """relu(LayerNorm(z)) over the last axis (biased variance, eps=1e-5).

    Row sums go through the MXU (dot with a ones column) instead of cross-lane
    jnp.sum -> relieves the XLU, which is the saturating unit at these narrow
    feature widths.  Centered two-pass variance avoids cancellation.
    """
    n = z.shape[-1]
    inv_n = 1.0 / n
    ones_col = jnp.ones((n, 1), jnp.float32)
    mean = jnp.dot(z, ones_col, preferred_element_type=jnp.float32) * inv_n   # [tm,1]
    c = z - mean
    var = jnp.dot(c * c, ones_col, preferred_element_type=jnp.float32) * inv_n
    zn = c * jax.lax.rsqrt(var + EPS)                                         # EUP
    return jnp.maximum(zn * g_ref[...] + t_ref[...], 0.0)


def _mlp(x, w_ref, b_ref, g_ref, t_ref):
    return _ln_relu(_linear(x, w_ref, b_ref), g_ref, t_ref)


# ----------------------------------------------------------------------------
# Fused forward kernel (entire Imputation.forward, istrain=True)
# ----------------------------------------------------------------------------
def imputation_fused_kernel(
    # batch-tiled activations
    sc_ref, st_ref, ss_ref,
    # resident weights (constant index maps); W: [in, out], b/g/t: [1, out]
    w_e1c, b_e1c, g_e1c, t_e1c,      # st_enc1_cont
    w_e2c, b_e2c, g_e2c, t_e2c,      # st_enc2_cont
    w_e1s, b_e1s, g_e1s, t_e1s,      # st_enc1_style
    w_e2s, b_e2s, g_e2s, t_e2s,      # st_enc2_style
    w_s2c, b_s2c, g_s2c, t_s2c,      # sc_enc2_cont
    w_s1c, b_s1c, g_s1c, t_s1c,      # sc_enc1_cont
    w_es2, b_es2, g_es2, t_es2,      # enc_style2
    w_es1, b_es1, g_es1, t_es1,      # enc_style1
    w_d2,  b_d2,  g_d2,  t_d2,       # st_dec2
    w_d1,  b_d1,                     # st_dec1 (use_norm=False -> no gamma/beta)
    # outputs
    enc_ref, st_real_ref, st_fake_ref,
):
    sc = sc_ref[...]
    st = st_ref[...]
    ss = ss_ref[...]
    tm = st.shape[0]

    # --- ST encoder --------------------------------------------------------
    st_cont1 = _mlp(st, w_e1c, b_e1c, g_e1c, t_e1c)
    st_cont2 = _mlp(st_cont1, w_e2c, b_e2c, g_e2c, t_e2c)
    st_style1 = _mlp(st, w_e1s, b_e1s, g_e1s, t_e1s)
    st_style2 = _mlp(st_style1, w_e2s, b_e2s, g_e2s, t_e2s)

    # --- SC encoder --------------------------------------------------------
    sc_cont2 = _mlp(sc, w_s2c, b_s2c, g_s2c, t_s2c)
    sc_cont1 = _mlp(sc_cont2, w_s1c, b_s1c, g_s1c, t_s1c)

    # --- Fake styles -------------------------------------------------------
    fake_style2 = _mlp(ss, w_es2, b_es2, g_es2, t_es2)
    fake_style1 = _mlp(ss, w_es1, b_es1, g_es1, t_es1)

    # --- Decoder: real & fake paths as two matmuls on resident shared weights
    real_up2 = _mlp(st_cont2 * st_style2, w_d2, b_d2, g_d2, t_d2)
    st_real = _linear(real_up2 + st_cont1 * st_style1, w_d1, b_d1)
    fake_up2 = _mlp(sc_cont2 * fake_style2, w_d2, b_d2, g_d2, t_d2)
    st_fake = _linear(fake_up2 + sc_cont1 * fake_style1, w_d1, b_d1)

    # --- Lane-dense writeback ----------------------------------------------
    parts = [st_cont1, st_cont2, sc_cont1, sc_cont2,
             st_style1, st_style2, fake_style1, fake_style2]   # order == ENC_NAMES
    total = sum(p.shape[-1] for p in parts)
    pad = enc_ref.shape[-1] - total
    if pad > 0:
        parts.append(jnp.zeros((tm, pad), jnp.float32))
    enc_ref[...] = jnp.concatenate(parts, axis=-1).astype(enc_ref.dtype)
    st_real_ref[...] = st_real.astype(st_real_ref.dtype)
    st_fake_ref[...] = st_fake.astype(st_fake_ref.dtype)


# ----------------------------------------------------------------------------
# One-time parameter packing (hoisted out of the per-call path)
# ----------------------------------------------------------------------------
def prepare_imputation_params(params):
    packed = {}
    for name in LAYER_ORDER:
        W, b, g, t = params[name]
        if name == "st_dec1":                      # use_norm=False -> no gamma/beta
            packed[name] = (W, b.reshape(1, -1))
        else:
            packed[name] = (W, b.reshape(1, -1), g.reshape(1, -1), t.reshape(1, -1))
    return packed


# ----------------------------------------------------------------------------
# Wrapper: single pallas_call for the whole forward (istrain=True)
# ----------------------------------------------------------------------------
def imputation_forward_train(packed, sc, st, ststyle, tm=None):
    M, scdim = sc.shape
    _, stdim = st.shape
    _, style_dim = ststyle.shape
    h1 = packed["st_enc1_cont"][0].shape[1]
    h2 = packed["st_enc2_cont"][0].shape[1]

    if tm is None:
        tm = min(128, _round_up(M, 8))                 # sublane-aligned tile
        if M > 8:
            # guarantee >= 2 grid steps so the "parallel" batch axis can shard
            # across v7x's two TensorCores
            tm = min(tm, _round_up(pl.cdiv(M, 2), 8))
    grid = (pl.cdiv(M, tm),)

    enc_widths = [h1, h2, h1, h2, h1, h2, h1, h2]      # matches ENC_NAMES / kernel concat
    enc_total = sum(enc_widths)
    enc_padded = _round_up(enc_total, 128)

    def act_spec(n):
        return pl.BlockSpec((tm, n), lambda i: (i, 0))

    def w_spec(shape):
        return pl.BlockSpec(shape, lambda i: (0, 0))

    in_specs = [act_spec(scdim), act_spec(stdim), act_spec(style_dim)]
    args = [sc, st, ststyle]
    for name in LAYER_ORDER:
        for a in packed[name]:
            in_specs.append(w_spec(a.shape))
            args.append(a)

    out_specs = (act_spec(enc_padded), act_spec(stdim), act_spec(stdim))
    out_shape = (jax.ShapeDtypeStruct((M, enc_padded), st.dtype),
                 jax.ShapeDtypeStruct((M, stdim), st.dtype),
                 jax.ShapeDtypeStruct((M, stdim), st.dtype))

    # advisory cost hint for the XLA scheduler
    mm_kn = (2 * stdim * h1 + 2 * h1 * h2 + scdim * h2 + h2 * h1
             + style_dim * h2 + style_dim * h1 + 2 * h2 * h1 + 2 * h1 * stdim)
    ln_n = [h1, h2, h1, h2, h2, h1, h2, h1, h1]
    flops = int(2 * M * mm_kn + sum(8 * M * n for n in ln_n))
    bytes_accessed = int(sum(int(a.size) for a in args) * 4
                         + (M * enc_padded + 2 * M * stdim) * 4)
    cost = pl.CostEstimate(flops=flops, transcendentals=int(9 * M),
                           bytes_accessed=bytes_accessed)

    enc_slab, st_real, st_fake = pl.pallas_call(
        imputation_fused_kernel,
        out_shape=out_shape,
        grid=grid,
        in_specs=in_specs,
        out_specs=out_specs,
        compiler_params=pltpu.CompilerParams(
            dimension_semantics=("parallel",),
            vmem_limit_bytes=32 * 1024 * 1024),
        cost_estimate=cost,
    )(*args)

    out = {}
    off = 0
    for name, w in zip(ENC_NAMES, enc_widths):
        out[name] = enc_slab[:, off:off + w]
        off += w
    out["st_real"] = st_real
    out["st_fake"] = st_fake
    return out
    # TODO(synk): optimizer / loss / backward of ImputeModule are training
    # infrastructure, not part of the forward pass, and are omitted.


# ----------------------------------------------------------------------------
# Parameter construction (deterministic; mirrors Imputation.__init__ shapes)
# ----------------------------------------------------------------------------
def make_mlp_params(key, in_dim, out_dim):
    k1, k2 = jax.random.split(key)
    scale = 1.0 / jnp.sqrt(jnp.float32(in_dim))
    W = jax.random.uniform(k1, (in_dim, out_dim), jnp.float32, -scale, scale)
    b = jax.random.uniform(k2, (out_dim,), jnp.float32, -scale, scale)
    gamma = jnp.ones((out_dim,), jnp.float32)
    beta = jnp.zeros((out_dim,), jnp.float32)
    return (W, b, gamma, beta)


def make_imputation_params(key, scdim, stdim, style_dim, hidden_dims):
    h2, h1 = hidden_dims
    names_dims = [
        ("st_enc1_cont", stdim, h1),
        ("st_enc2_cont", h1, h2),
        ("st_enc1_style", stdim, h1),
        ("st_enc2_style", h1, h2),
        ("st_dec2", h2, h1),
        ("st_dec1", h1, stdim),
        ("sc_enc2_cont", scdim, h2),
        ("sc_enc1_cont", h2, h1),
        ("enc_style2", style_dim, h2),
        ("enc_style1", style_dim, h1),
    ]
    keys = jax.random.split(key, len(names_dims))
    return {name: make_mlp_params(k, di, do)
            for k, (name, di, do) in zip(keys, names_dims)}


# ----------------------------------------------------------------------------
# Pure-JAX reference (for validation only)
# ----------------------------------------------------------------------------
def _ref_mlp(x, lp, use_norm=True):
    W, b, g, t = lp
    z = x @ W + b
    if use_norm:
        mean = jnp.mean(z, axis=-1, keepdims=True)
        var = jnp.mean((z - mean) ** 2, axis=-1, keepdims=True)
        z = (z - mean) / jnp.sqrt(var + EPS) * g + t
        z = jnp.maximum(z, 0.0)
    return z


def imputation_forward_train_ref(params, sc, st, ststyle):
    p = params
    st_cont1 = _ref_mlp(st, p["st_enc1_cont"])
    st_cont2 = _ref_mlp(st_cont1, p["st_enc2_cont"])
    st_style1 = _ref_mlp(st, p["st_enc1_style"])
    st_style2 = _ref_mlp(st_style1, p["st_enc2_style"])
    sc_cont2 = _ref_mlp(sc, p["sc_enc2_cont"])
    sc_cont1 = _ref_mlp(sc_cont2, p["sc_enc1_cont"])
    fake_style2 = _ref_mlp(ststyle, p["enc_style2"])
    fake_style1 = _ref_mlp(ststyle, p["enc_style1"])
    real_up2 = _ref_mlp(st_cont2 * st_style2, p["st_dec2"])
    st_real = _ref_mlp(real_up2 + st_cont1 * st_style1, p["st_dec1"], use_norm=False)
    fake_up2 = _ref_mlp(sc_cont2 * fake_style2, p["st_dec2"])
    st_fake = _ref_mlp(fake_up2 + sc_cont1 * fake_style1, p["st_dec1"], use_norm=False)
    return {
        "st_cont1": st_cont1, "st_cont2": st_cont2,
        "sc_cont1": sc_cont1, "sc_cont2": sc_cont2,
        "st_style1": st_style1, "st_style2": st_style2,
        "fake_style1": fake_style1, "fake_style2": fake_style2,
        "st_real": st_real, "st_fake": st_fake,
    }


# ----------------------------------------------------------------------------
# main
# ----------------------------------------------------------------------------
if __name__ == "__main__":
    # Small shapes consistent with the module: opt.sc_dim, opt.st_dim,
    # opt.style_dim, opt.model_layers = (h2, h1)
    batch = 8
    scdim, stdim, style_dim = 24, 16, 12
    hidden_dims = (16, 32)  # (h2, h1)

    key = jax.random.PRNGKey(0)
    kp, ksc, kst, kss = jax.random.split(key, 4)

    params = make_imputation_params(kp, scdim, stdim, style_dim, hidden_dims)
    packed = prepare_imputation_params(params)   # one-time packing (hoisted)

    scx = jax.random.normal(ksc, (batch, scdim), jnp.float32)
    stx = jax.random.normal(kst, (batch, stdim), jnp.float32)
    st_style = jax.random.normal(kss, (batch, style_dim), jnp.float32)

    out = imputation_forward_train(packed, scx, stx, st_style)
    out = jax.tree_util.tree_map(jax.block_until_ready, out)

    # sanity: shapes match the PyTorch semantics
    h2, h1 = hidden_dims
    assert out["st_cont1"].shape == (batch, h1)
    assert out["st_cont2"].shape == (batch, h2)
    assert out["sc_cont1"].shape == (batch, h1)
    assert out["sc_cont2"].shape == (batch, h2)
    assert out["st_style1"].shape == (batch, h1)
    assert out["st_style2"].shape == (batch, h2)
    assert out["fake_style1"].shape == (batch, h1)
    assert out["fake_style2"].shape == (batch, h2)
    assert out["st_real"].shape == (batch, stdim)
    assert out["st_fake"].shape == (batch, stdim)

    # numerical check vs. pure-JAX reference (loose tol: MXU f32 matmul precision)
    ref = imputation_forward_train_ref(params, scx, stx, st_style)
    for k in out:
        err = float(jnp.max(jnp.abs(out[k] - ref[k])))
        assert err < 5e-2, (k, err)

    print("KERNEL_OK")
</pallas_src>

<mosaic_0001>
module attributes {stable_mosaic.version = 11 : i64} {
  func.func @imputation_fused_kernel(%arg0: i32, %arg1: memref<8x24xf32, #tpu.memory_space<vmem>>, %arg2: memref<8x16xf32, #tpu.memory_space<vmem>>, %arg3: memref<8x12xf32, #tpu.memory_space<vmem>>, %arg4: memref<16x32xf32, #tpu.memory_space<vmem>>, %arg5: memref<1x32xf32, #tpu.memory_space<vmem>>, %arg6: memref<1x32xf32, #tpu.memory_space<vmem>>, %arg7: memref<1x32xf32, #tpu.memory_space<vmem>>, %arg8: memref<32x16xf32, #tpu.memory_space<vmem>>, %arg9: memref<1x16xf32, #tpu.memory_space<vmem>>, %arg10: memref<1x16xf32, #tpu.memory_space<vmem>>, %arg11: memref<1x16xf32, #tpu.memory_space<vmem>>, %arg12: memref<16x32xf32, #tpu.memory_space<vmem>>, %arg13: memref<1x32xf32, #tpu.memory_space<vmem>>, %arg14: memref<1x32xf32, #tpu.memory_space<vmem>>, %arg15: memref<1x32xf32, #tpu.memory_space<vmem>>, %arg16: memref<32x16xf32, #tpu.memory_space<vmem>>, %arg17: memref<1x16xf32, #tpu.memory_space<vmem>>, %arg18: memref<1x16xf32, #tpu.memory_space<vmem>>, %arg19: memref<1x16xf32, #tpu.memory_space<vmem>>, %arg20: memref<24x16xf32, #tpu.memory_space<vmem>>, %arg21: memref<1x16xf32, #tpu.memory_space<vmem>>, %arg22: memref<1x16xf32, #tpu.memory_space<vmem>>, %arg23: memref<1x16xf32, #tpu.memory_space<vmem>>, %arg24: memref<16x32xf32, #tpu.memory_space<vmem>>, %arg25: memref<1x32xf32, #tpu.memory_space<vmem>>, %arg26: memref<1x32xf32, #tpu.memory_space<vmem>>, %arg27: memref<1x32xf32, #tpu.memory_space<vmem>>, %arg28: memref<12x16xf32, #tpu.memory_space<vmem>>, %arg29: memref<1x16xf32, #tpu.memory_space<vmem>>, %arg30: memref<1x16xf32, #tpu.memory_space<vmem>>, %arg31: memref<1x16xf32, #tpu.memory_space<vmem>>, %arg32: memref<12x32xf32, #tpu.memory_space<vmem>>, %arg33: memref<1x32xf32, #tpu.memory_space<vmem>>, %arg34: memref<1x32xf32, #tpu.memory_space<vmem>>, %arg35: memref<1x32xf32, #tpu.memory_space<vmem>>, %arg36: memref<16x32xf32, #tpu.memory_space<vmem>>, %arg37: memref<1x32xf32, #tpu.memory_space<vmem>>, %arg38: memref<1x32xf32, #tpu.memory_space<vmem>>, %arg39: memref<1x32xf32, #tpu.memory_space<vmem>>, %arg40: memref<32x16xf32, #tpu.memory_space<vmem>>, %arg41: memref<1x16xf32, #tpu.memory_space<vmem>>, %arg42: memref<8x256xf32, #tpu.memory_space<vmem>>, %arg43: memref<8x16xf32, #tpu.memory_space<vmem>>, %arg44: memref<8x16xf32, #tpu.memory_space<vmem>>) attributes {dimension_semantics = [#tpu.dimension_semantics<parallel>], iteration_bounds = array<i64: 1>, scalar_prefetch = 0 : i64, scratch_operands = 0 : i64, tpu.core_type = #tpu.core_type<tc>, window_params = [{transform_indices = @transform_0, window_bounds = array<i64: 8, 24>}, {transform_indices = @transform_1, window_bounds = array<i64: 8, 16>}, {transform_indices = @transform_2, window_bounds = array<i64: 8, 12>}, {pipeline_mode = #tpu.pipeline_mode<synchronous>, transform_indices = @transform_3, window_bounds = array<i64: 16, 32>}, {pipeline_mode = #tpu.pipeline_mode<synchronous>, transform_indices = @transform_4, window_bounds = array<i64: 1, 32>}, {pipeline_mode = #tpu.pipeline_mode<synchronous>, transform_indices = @transform_5, window_bounds = array<i64: 1, 32>}, {pipeline_mode = #tpu.pipeline_mode<synchronous>, transform_indices = @transform_6, window_bounds = array<i64: 1, 32>}, {pipeline_mode = #tpu.pipeline_mode<synchronous>, transform_indices = @transform_7, window_bounds = array<i64: 32, 16>}, {pipeline_mode = #tpu.pipeline_mode<synchronous>, transform_indices = @transform_8, window_bounds = array<i64: 1, 16>}, {pipeline_mode = #tpu.pipeline_mode<synchronous>, transform_indices = @transform_9, window_bounds = array<i64: 1, 16>}, {pipeline_mode = #tpu.pipeline_mode<synchronous>, transform_indices = @transform_10, window_bounds = array<i64: 1, 16>}, {pipeline_mode = #tpu.pipeline_mode<synchronous>, transform_indices = @transform_11, window_bounds = array<i64: 16, 32>}, {pipeline_mode = #tpu.pipeline_mode<synchronous>, transform_indices = @transform_12, window_bounds = array<i64: 1, 32>}, {pipeline_mode = #tpu.pipeline_mode<synchronous>, transform_indices = @transform_13, window_bounds = array<i64: 1, 32>}, {pipeline_mode = #tpu.pipeline_mode<synchronous>, transform_indices = @transform_14, window_bounds = array<i64: 1, 32>}, {pipeline_mode = #tpu.pipeline_mode<synchronous>, transform_indices = @transform_15, window_bounds = array<i64: 32, 16>}, {pipeline_mode = #tpu.pipeline_mode<synchronous>, transform_indices = @transform_16, window_bounds = array<i64: 1, 16>}, {pipeline_mode = #tpu.pipeline_mode<synchronous>, transform_indices = @transform_17, window_bounds = array<i64: 1, 16>}, {pipeline_mode = #tpu.pipeline_mode<synchronous>, transform_indices = @transform_18, window_bounds = array<i64: 1, 16>}, {pipeline_mode = #tpu.pipeline_mode<synchronous>, transform_indices = @transform_19, window_bounds = array<i64: 24, 16>}, {pipeline_mode = #tpu.pipeline_mode<synchronous>, transform_indices = @transform_20, window_bounds = array<i64: 1, 16>}, {pipeline_mode = #tpu.pipeline_mode<synchronous>, transform_indices = @transform_21, window_bounds = array<i64: 1, 16>}, {pipeline_mode = #tpu.pipeline_mode<synchronous>, transform_indices = @transform_22, window_bounds = array<i64: 1, 16>}, {pipeline_mode = #tpu.pipeline_mode<synchronous>, transform_indices = @transform_23, window_bounds = array<i64: 16, 32>}, {pipeline_mode = #tpu.pipeline_mode<synchronous>, transform_indices = @transform_24, window_bounds = array<i64: 1, 32>}, {pipeline_mode = #tpu.pipeline_mode<synchronous>, transform_indices = @transform_25, window_bounds = array<i64: 1, 32>}, {pipeline_mode = #tpu.pipeline_mode<synchronous>, transform_indices = @transform_26, window_bounds = array<i64: 1, 32>}, {pipeline_mode = #tpu.pipeline_mode<synchronous>, transform_indices = @transform_27, window_bounds = array<i64: 12, 16>}, {pipeline_mode = #tpu.pipeline_mode<synchronous>, transform_indices = @transform_28, window_bounds = array<i64: 1, 16>}, {pipeline_mode = #tpu.pipeline_mode<synchronous>, transform_indices = @transform_29, window_bounds = array<i64: 1, 16>}, {pipeline_mode = #tpu.pipeline_mode<synchronous>, transform_indices = @transform_30, window_bounds = array<i64: 1, 16>}, {pipeline_mode = #tpu.pipeline_mode<synchronous>, transform_indices = @transform_31, window_bounds = array<i64: 12, 32>}, {pipeline_mode = #tpu.pipeline_mode<synchronous>, transform_indices = @transform_32, window_bounds = array<i64: 1, 32>}, {pipeline_mode = #tpu.pipeline_mode<synchronous>, transform_indices = @transform_33, window_bounds = array<i64: 1, 32>}, {pipeline_mode = #tpu.pipeline_mode<synchronous>, transform_indices = @transform_34, window_bounds = array<i64: 1, 32>}, {pipeline_mode = #tpu.pipeline_mode<synchronous>, transform_indices = @transform_35, window_bounds = array<i64: 16, 32>}, {pipeline_mode = #tpu.pipeline_mode<synchronous>, transform_indices = @transform_36, window_bounds = array<i64: 1, 32>}, {pipeline_mode = #tpu.pipeline_mode<synchronous>, transform_indices = @transform_37, window_bounds = array<i64: 1, 32>}, {pipeline_mode = #tpu.pipeline_mode<synchronous>, transform_indices = @transform_38, window_bounds = array<i64: 1, 32>}, {pipeline_mode = #tpu.pipeline_mode<synchronous>, transform_indices = @transform_39, window_bounds = array<i64: 32, 16>}, {pipeline_mode = #tpu.pipeline_mode<synchronous>, transform_indices = @transform_40, window_bounds = array<i64: 1, 16>}, {transform_indices = @transform_41, window_bounds = array<i64: 8, 256>}, {transform_indices = @transform_42, window_bounds = array<i64: 8, 16>}, {transform_indices = @transform_43, window_bounds = array<i64: 8, 16>}]} {
    %c0 = arith.constant 0 : index
    %c0_0 = arith.constant 0 : index
    %0 = vector.load %arg1[%c0, %c0_0] : memref<8x24xf32, #tpu.memory_space<vmem>>, vector<8x24xf32>
    %c0_1 = arith.constant 0 : index
    %c0_2 = arith.constant 0 : index
    %1 = vector.load %arg2[%c0_1, %c0_2] : memref<8x16xf32, #tpu.memory_space<vmem>>, vector<8x16xf32>
    %c0_3 = arith.constant 0 : index
    %c0_4 = arith.constant 0 : index
    %2 = vector.load %arg3[%c0_3, %c0_4] : memref<8x12xf32, #tpu.memory_space<vmem>>, vector<8x12xf32>
    %c0_5 = arith.constant 0 : index
    %c0_6 = arith.constant 0 : index
    %3 = vector.load %arg4[%c0_5, %c0_6] : memref<16x32xf32, #tpu.memory_space<vmem>>, vector<16x32xf32>
    %cst = arith.constant dense<0.000000e+00> : vector<8x32xf32>
    %4 = tpu.matmul %1, %3, %cst {dimension_numbers = #tpu.dot_dimension_numbers<[1], [0], [0], [1], [0, 0, 1, 1], [], []>} : vector<8x16xf32>, vector<16x32xf32>, vector<8x32xf32> -> vector<8x32xf32>
    %c0_7 = arith.constant 0 : index
    %c0_8 = arith.constant 0 : index
    %5 = vector.load %arg5[%c0_7, %c0_8] : memref<1x32xf32, #tpu.memory_space<vmem>>, vector<1x32xf32>
    %6 = vector.broadcast %5 : vector<1x32xf32> to vector<8x32xf32>
    %7 = arith.addf %4, %6 : vector<8x32xf32>
    %cst_9 = arith.constant 1.000000e+00 : f32
    %8 = vector.broadcast %cst_9 : f32 to vector<32x1xf32>
    %cst_10 = arith.constant dense<0.000000e+00> : vector<8x1xf32>
    %9 = tpu.matmul %7, %8, %cst_10 {dimension_numbers = #tpu.dot_dimension_numbers<[1], [0], [0], [1], [0, 0, 1, 1], [], []>} : vector<8x32xf32>, vector<32x1xf32>, vector<8x1xf32> -> vector<8x1xf32>
    %cst_11 = arith.constant 3.125000e-02 : f32
    %10 = vector.broadcast %cst_11 : f32 to vector<8x1xf32>
    %11 = arith.mulf %9, %10 : vector<8x1xf32>
    %12 = vector.broadcast %11 : vector<8x1xf32> to vector<8x32xf32>
    %13 = arith.subf %7, %12 : vector<8x32xf32>
    %14 = arith.mulf %13, %13 : vector<8x32xf32>
    %cst_12 = arith.constant dense<0.000000e+00> : vector<8x1xf32>
    %15 = tpu.matmul %14, %8, %cst_12 {dimension_numbers = #tpu.dot_dimension_numbers<[1], [0], [0], [1], [0, 0, 1, 1], [], []>} : vector<8x32xf32>, vector<32x1xf32>, vector<8x1xf32> -> vector<8x1xf32>
    %cst_13 = arith.constant 3.125000e-02 : f32
    %16 = vector.broadcast %cst_13 : f32 to vector<8x1xf32>
    %17 = arith.mulf %15, %16 : vector<8x1xf32>
    %cst_14 = arith.constant 9.99999974E-6 : f32
    %18 = vector.broadcast %cst_14 : f32 to vector<8x1xf32>
    %19 = arith.addf %17, %18 : vector<8x1xf32>
    %20 = math.rsqrt %19 : vector<8x1xf32>
    %21 = vector.broadcast %20 : vector<8x1xf32> to vector<8x32xf32>
    %22 = arith.mulf %13, %21 : vector<8x32xf32>
    %c0_15 = arith.constant 0 : index
    %c0_16 = arith.constant 0 : index
    %23 = vector.load %arg6[%c0_15, %c0_16] : memref<1x32xf32, #tpu.memory_space<vmem>>, vector<1x32xf32>
    %24 = vector.broadcast %23 : vector<1x32xf32> to vector<8x32xf32>
    %25 = arith.mulf %22, %24 : vector<8x32xf32>
    %c0_17 = arith.constant 0 : index
    %c0_18 = arith.constant 0 : index
    %26 = vector.load %arg7[%c0_17, %c0_18] : memref<1x32xf32, #tpu.memory_space<vmem>>, vector<1x32xf32>
    %27 = vector.broadcast %26 : vector<1x32xf32> to vector<8x32xf32>
    %28 = arith.addf %25, %27 : vector<8x32xf32>
    %cst_19 = arith.constant 0.000000e+00 : f32
    %29 = vector.broadcast %cst_19 : f32 to vector<8x32xf32>
    %30 = arith.maximumf %28, %29 : vector<8x32xf32>
    %c0_20 = arith.constant 0 : index
    %c0_21 = arith.constant 0 : index
    %31 = vector.load %arg8[%c0_20, %c0_21] : memref<32x16xf32, #tpu.memory_space<vmem>>, vector<32x16xf32>
    %cst_22 = arith.constant dense<0.000000e+00> : vector<8x16xf32>
    %32 = tpu.matmul %30, %31, %cst_22 {dimension_numbers = #tpu.dot_dimension_numbers<[1], [0], [0], [1], [0, 0, 1, 1], [], []>} : vector<8x32xf32>, vector<32x16xf32>, vector<8x16xf32> -> vector<8x16xf32>
    %c0_23 = arith.constant 0 : index
    %c0_24 = arith.constant 0 : index
    %33 = vector.load %arg9[%c0_23, %c0_24] : memref<1x16xf32, #tpu.memory_space<vmem>>, vector<1x16xf32>
    %34 = vector.broadcast %33 : vector<1x16xf32> to vector<8x16xf32>
    %35 = arith.addf %32, %34 : vector<8x16xf32>
    %cst_25 = arith.constant 1.000000e+00 : f32
    %36 = vector.broadcast %cst_25 : f32 to vector<16x1xf32>
    %cst_26 = arith.constant dense<0.000000e+00> : vector<8x1xf32>
    %37 = tpu.matmul %35, %36, %cst_26 {dimension_numbers = #tpu.dot_dimension_numbers<[1], [0], [0], [1], [0, 0, 1, 1], [], []>} : vector<8x16xf32>, vector<16x1xf32>, vector<8x1xf32> -> vector<8x1xf32>
    %cst_27 = arith.constant 6.250000e-02 : f32
    %38 = vector.broadcast %cst_27 : f32 to vector<8x1xf32>
    %39 = arith.mulf %37, %38 : vector<8x1xf32>
    %40 = vector.broadcast %39 : vector<8x1xf32> to vector<8x16xf32>
    %41 = arith.subf %35, %40 : vector<8x16xf32>
    %42 = arith.mulf %41, %41 : vector<8x16xf32>
    %cst_28 = arith.constant dense<0.000000e+00> : vector<8x1xf32>
    %43 = tpu.matmul %42, %36, %cst_28 {dimension_numbers = #tpu.dot_dimension_numbers<[1], [0], [0], [1], [0, 0, 1, 1], [], []>} : vector<8x16xf32>, vector<16x1xf32>, vector<8x1xf32> -> vector<8x1xf32>
    %cst_29 = arith.constant 6.250000e-02 : f32
    %44 = vector.broadcast %cst_29 : f32 to vector<8x1xf32>
    %45 = arith.mulf %43, %44 : vector<8x1xf32>
    %cst_30 = arith.constant 9.99999974E-6 : f32
    %46 = vector.broadcast %cst_30 : f32 to vector<8x1xf32>
    %47 = arith.addf %45, %46 : vector<8x1xf32>
    %48 = math.rsqrt %47 : vector<8x1xf32>
    %49 = vector.broadcast %48 : vector<8x1xf32> to vector<8x16xf32>
    %50 = arith.mulf %41, %49 : vector<8x16xf32>
    %c0_31 = arith.constant 0 : index
    %c0_32 = arith.constant 0 : index
    %51 = vector.load %arg10[%c0_31, %c0_32] : memref<1x16xf32, #tpu.memory_space<vmem>>, vector<1x16xf32>
    %52 = vector.broadcast %51 : vector<1x16xf32> to vector<8x16xf32>
    %53 = arith.mulf %50, %52 : vector<8x16xf32>
    %c0_33 = arith.constant 0 : index
    %c0_34 = arith.constant 0 : index
    %54 = vector.load %arg11[%c0_33, %c0_34] : memref<1x16xf32, #tpu.memory_space<vmem>>, vector<1x16xf32>
    %55 = vector.broadcast %54 : vector<1x16xf32> to vector<8x16xf32>
    %56 = arith.addf %53, %55 : vector<8x16xf32>
    %cst_35 = arith.constant 0.000000e+00 : f32
    %57 = vector.broadcast %cst_35 : f32 to vector<8x16xf32>
    %58 = arith.maximumf %56, %57 : vector<8x16xf32>
    %c0_36 = arith.constant 0 : index
    %c0_37 = arith.constant 0 : index
    %59 = vector.load %arg12[%c0_36, %c0_37] : memref<16x32xf32, #tpu.memory_space<vmem>>, vector<16x32xf32>
    %cst_38 = arith.constant dense<0.000000e+00> : vector<8x32xf32>
    %60 = tpu.matmul %1, %59, %cst_38 {dimension_numbers = #tpu.dot_dimension_numbers<[1], [0], [0], [1], [0, 0, 1, 1], [], []>} : vector<8x16xf32>, vector<16x32xf32>, vector<8x32xf32> -> vector<8x32xf32>
    %c0_39 = arith.constant 0 : index
    %c0_40 = arith.constant 0 : index
    %61 = vector.load %arg13[%c0_39, %c0_40] : memref<1x32xf32, #tpu.memory_space<vmem>>, vector<1x32xf32>
    %62 = vector.broadcast %61 : vector<1x32xf32> to vector<8x32xf32>
    %63 = arith.addf %60, %62 : vector<8x32xf32>
    %cst_41 = arith.constant 1.000000e+00 : f32
    %64 = vector.broadcast %cst_41 : f32 to vector<32x1xf32>
    %cst_42 = arith.constant dense<0.000000e+00> : vector<8x1xf32>
    %65 = tpu.matmul %63, %64, %cst_42 {dimension_numbers = #tpu.dot_dimension_numbers<[1], [0], [0], [1], [0, 0, 1, 1], [], []>} : vector<8x32xf32>, vector<32x1xf32>, vector<8x1xf32> -> vector<8x1xf32>
    %cst_43 = arith.constant 3.125000e-02 : f32
    %66 = vector.broadcast %cst_43 : f32 to vector<8x1xf32>
    %67 = arith.mulf %65, %66 : vector<8x1xf32>
    %68 = vector.broadcast %67 : vector<8x1xf32> to vector<8x32xf32>
    %69 = arith.subf %63, %68 : vector<8x32xf32>
    %70 = arith.mulf %69, %69 : vector<8x32xf32>
    %cst_44 = arith.constant dense<0.000000e+00> : vector<8x1xf32>
    %71 = tpu.matmul %70, %64, %cst_44 {dimension_numbers = #tpu.dot_dimension_numbers<[1], [0], [0], [1], [0, 0, 1, 1], [], []>} : vector<8x32xf32>, vector<32x1xf32>, vector<8x1xf32> -> vector<8x1xf32>
    %cst_45 = arith.constant 3.125000e-02 : f32
    %72 = vector.broadcast %cst_45 : f32 to vector<8x1xf32>
    %73 = arith.mulf %71, %72 : vector<8x1xf32>
    %cst_46 = arith.constant 9.99999974E-6 : f32
    %74 = vector.broadcast %cst_46 : f32 to vector<8x1xf32>
    %75 = arith.addf %73, %74 : vector<8x1xf32>
    %76 = math.rsqrt %75 : vector<8x1xf32>
    %77 = vector.broadcast %76 : vector<8x1xf32> to vector<8x32xf32>
    %78 = arith.mulf %69, %77 : vector<8x32xf32>
    %c0_47 = arith.constant 0 : index
    %c0_48 = arith.constant 0 : index
    %79 = vector.load %arg14[%c0_47, %c0_48] : memref<1x32xf32, #tpu.memory_space<vmem>>, vector<1x32xf32>
    %80 = vector.broadcast %79 : vector<1x32xf32> to vector<8x32xf32>
    %81 = arith.mulf %78, %80 : vector<8x32xf32>
    %c0_49 = arith.constant 0 : index
    %c0_50 = arith.constant 0 : index
    %82 = vector.load %arg15[%c0_49, %c0_50] : memref<1x32xf32, #tpu.memory_space<vmem>>, vector<1x32xf32>
    %83 = vector.broadcast %82 : vector<1x32xf32> to vector<8x32xf32>
    %84 = arith.addf %81, %83 : vector<8x32xf32>
    %cst_51 = arith.constant 0.000000e+00 : f32
    %85 = vector.broadcast %cst_51 : f32 to vector<8x32xf32>
    %86 = arith.maximumf %84, %85 : vector<8x32xf32>
    %c0_52 = arith.constant 0 : index
    %c0_53 = arith.constant 0 : index
    %87 = vector.load %arg16[%c0_52, %c0_53] : memref<32x16xf32, #tpu.memory_space<vmem>>, vector<32x16xf32>
    %cst_54 = arith.constant dense<0.000000e+00> : vector<8x16xf32>
    %88 = tpu.matmul %86, %87, %cst_54 {dimension_numbers = #tpu.dot_dimension_numbers<[1], [0], [0], [1], [0, 0, 1, 1], [], []>} : vector<8x32xf32>, vector<32x16xf32>, vector<8x16xf32> -> vector<8x16xf32>
    %c0_55 = arith.constant 0 : index
    %c0_56 = arith.constant 0 : index
    %89 = vector.load %arg17[%c0_55, %c0_56] : memref<1x16xf32, #tpu.memory_space<vmem>>, vector<1x16xf32>
    %90 = vector.broadcast %89 : vector<1x16xf32> to vector<8x16xf32>
    %91 = arith.addf %88, %90 : vector<8x16xf32>
    %cst_57 = arith.constant 1.000000e+00 : f32
    %92 = vector.broadcast %cst_57 : f32 to vector<16x1xf32>
    %cst_58 = arith.constant dense<0.000000e+00> : vector<8x1xf32>
    %93 = tpu.matmul %91, %92, %cst_58 {dimension_numbers = #tpu.dot_dimension_numbers<[1], [0], [0], [1], [0, 0, 1, 1], [], []>} : vector<8x16xf32>, vector<16x1xf32>, vector<8x1xf32> -> vector<8x1xf32>
    %cst_59 = arith.constant 6.250000e-02 : f32
    %94 = vector.broadcast %cst_59 : f32 to vector<8x1xf32>
    %95 = arith.mulf %93, %94 : vector<8x1xf32>
    %96 = vector.broadcast %95 : vector<8x1xf32> to vector<8x16xf32>
    %97 = arith.subf %91, %96 : vector<8x16xf32>
    %98 = arith.mulf %97, %97 : vector<8x16xf32>
    %cst_60 = arith.constant dense<0.000000e+00> : vector<8x1xf32>
    %99 = tpu.matmul %98, %92, %cst_60 {dimension_numbers = #tpu.dot_dimension_numbers<[1], [0], [0], [1], [0, 0, 1, 1], [], []>} : vector<8x16xf32>, vector<16x1xf32>, vector<8x1xf32> -> vector<8x1xf32>
    %cst_61 = arith.constant 6.250000e-02 : f32
    %100 = vector.broadcast %cst_61 : f32 to vector<8x1xf32>
    %101 = arith.mulf %99, %100 : vector<8x1xf32>
    %cst_62 = arith.constant 9.99999974E-6 : f32
    %102 = vector.broadcast %cst_62 : f32 to vector<8x1xf32>
    %103 = arith.addf %101, %102 : vector<8x1xf32>
    %104 = math.rsqrt %103 : vector<8x1xf32>
    %105 = vector.broadcast %104 : vector<8x1xf32> to vector<8x16xf32>
    %106 = arith.mulf %97, %105 : vector<8x16xf32>
    %c0_63 = arith.constant 0 : index
    %c0_64 = arith.constant 0 : index
    %107 = vector.load %arg18[%c0_63, %c0_64] : memref<1x16xf32, #tpu.memory_space<vmem>>, vector<1x16xf32>
    %108 = vector.broadcast %107 : vector<1x16xf32> to vector<8x16xf32>
    %109 = arith.mulf %106, %108 : vector<8x16xf32>
    %c0_65 = arith.constant 0 : index
    %c0_66 = arith.constant 0 : index
    %110 = vector.load %arg19[%c0_65, %c0_66] : memref<1x16xf32, #tpu.memory_space<vmem>>, vector<1x16xf32>
    %111 = vector.broadcast %110 : vector<1x16xf32> to vector<8x16xf32>
    %112 = arith.addf %109, %111 : vector<8x16xf32>
    %cst_67 = arith.constant 0.000000e+00 : f32
    %113 = vector.broadcast %cst_67 : f32 to vector<8x16xf32>
    %114 = arith.maximumf %112, %113 : vector<8x16xf32>
    %c0_68 = arith.constant 0 : index
    %c0_69 = arith.constant 0 : index
    %115 = vector.load %arg20[%c0_68, %c0_69] : memref<24x16xf32, #tpu.memory_space<vmem>>, vector<24x16xf32>
    %cst_70 = arith.constant dense<0.000000e+00> : vector<8x16xf32>
    %116 = tpu.matmul %0, %115, %cst_70 {dimension_numbers = #tpu.dot_dimension_numbers<[1], [0], [0], [1], [0, 0, 1, 1], [], []>} : vector<8x24xf32>, vector<24x16xf32>, vector<8x16xf32> -> vector<8x16xf32>
    %c0_71 = arith.constant 0 : index
    %c0_72 = arith.constant 0 : index
    %117 = vector.load %arg21[%c0_71, %c0_72] : memref<1x16xf32, #tpu.memory_space<vmem>>, vector<1x16xf32>
    %118 = vector.broadcast %117 : vector<1x16xf32> to vector<8x16xf32>
    %119 = arith.addf %116, %118 : vector<8x16xf32>
    %cst_73 = arith.constant 1.000000e+00 : f32
    %120 = vector.broadcast %cst_73 : f32 to vector<16x1xf32>
    %cst_74 = arith.constant dense<0.000000e+00> : vector<8x1xf32>
    %121 = tpu.matmul %119, %120, %cst_74 {dimension_numbers = #tpu.dot_dimension_numbers<[1], [0], [0], [1], [0, 0, 1, 1], [], []>} : vector<8x16xf32>, vector<16x1xf32>, vector<8x1xf32> -> vector<8x1xf32>
    %cst_75 = arith.constant 6.250000e-02 : f32
    %122 = vector.broadcast %cst_75 : f32 to vector<8x1xf32>
    %123 = arith.mulf %121, %122 : vector<8x1xf32>
    %124 = vector.broadcast %123 : vector<8x1xf32> to vector<8x16xf32>
    %125 = arith.subf %119, %124 : vector<8x16xf32>
    %126 = arith.mulf %125, %125 : vector<8x16xf32>
    %cst_76 = arith.constant dense<0.000000e+00> : vector<8x1xf32>
    %127 = tpu.matmul %126, %120, %cst_76 {dimension_numbers = #tpu.dot_dimension_numbers<[1], [0], [0], [1], [0, 0, 1, 1], [], []>} : vector<8x16xf32>, vector<16x1xf32>, vector<8x1xf32> -> vector<8x1xf32>
    %cst_77 = arith.constant 6.250000e-02 : f32
    %128 = vector.broadcast %cst_77 : f32 to vector<8x1xf32>
    %129 = arith.mulf %127, %128 : vector<8x1xf32>
    %cst_78 = arith.constant 9.99999974E-6 : f32
    %130 = vector.broadcast %cst_78 : f32 to vector<8x1xf32>
    %131 = arith.addf %129, %130 : vector<8x1xf32>
    %132 = math.rsqrt %131 : vector<8x1xf32>
    %133 = vector.broadcast %132 : vector<8x1xf32> to vector<8x16xf32>
    %134 = arith.mulf %125, %133 : vector<8x16xf32>
    %c0_79 = arith.constant 0 : index
    %c0_80 = arith.constant 0 : index
    %135 = vector.load %arg22[%c0_79, %c0_80] : memref<1x16xf32, #tpu.memory_space<vmem>>, vector<1x16xf32>
    %136 = vector.broadcast %135 : vector<1x16xf32> to vector<8x16xf32>
    %137 = arith.mulf %134, %136 : vector<8x16xf32>
    %c0_81 = arith.constant 0 : index
    %c0_82 = arith.constant 0 : index
    %138 = vector.load %arg23[%c0_81, %c0_82] : memref<1x16xf32, #tpu.memory_space<vmem>>, vector<1x16xf32>
    %139 = vector.broadcast %138 : vector<1x16xf32> to vector<8x16xf32>
    %140 = arith.addf %137, %139 : vector<8x16xf32>
    %cst_83 = arith.constant 0.000000e+00 : f32
    %141 = vector.broadcast %cst_83 : f32 to vector<8x16xf32>
    %142 = arith.maximumf %140, %141 : vector<8x16xf32>
    %c0_84 = arith.constant 0 : index
    %c0_85 = arith.constant 0 : index
    %143 = vector.load %arg24[%c0_84, %c0_85] : memref<16x32xf32, #tpu.memory_space<vmem>>, vector<16x32xf32>
    %cst_86 = arith.constant dense<0.000000e+00> : vector<8x32xf32>
    %144 = tpu.matmul %142, %143, %cst_86 {dimension_numbers = #tpu.dot_dimension_numbers<[1], [0], [0], [1], [0, 0, 1, 1], [], []>} : vector<8x16xf32>, vector<16x32xf32>, vector<8x32xf32> -> vector<8x32xf32>
    %c0_87 = arith.constant 0 : index
    %c0_88 = arith.constant 0 : index
    %145 = vector.load %arg25[%c0_87, %c0_88] : memref<1x32xf32, #tpu.memory_space<vmem>>, vector<1x32xf32>
    %146 = vector.broadcast %145 : vector<1x32xf32> to vector<8x32xf32>
    %147 = arith.addf %144, %146 : vector<8x32xf32>
    %cst_89 = arith.constant 1.000000e+00 : f32
    %148 = vector.broadcast %cst_89 : f32 to vector<32x1xf32>
    %cst_90 = arith.constant dense<0.000000e+00> : vector<8x1xf32>
    %149 = tpu.matmul %147, %148, %cst_90 {dimension_numbers = #tpu.dot_dimension_numbers<[1], [0], [0], [1], [0, 0, 1, 1], [], []>} : vector<8x32xf32>, vector<32x1xf32>, vector<8x1xf32> -> vector<8x1xf32>
    %cst_91 = arith.constant 3.125000e-02 : f32
    %150 = vector.broadcast %cst_91 : f32 to vector<8x1xf32>
    %151 = arith.mulf %149, %150 : vector<8x1xf32>
    %152 = vector.broadcast %151 : vector<8x1xf32> to vector<8x32xf32>
    %153 = arith.subf %147, %152 : vector<8x32xf32>
    %154 = arith.mulf %153, %153 : vector<8x32xf32>
    %cst_92 = arith.constant dense<0.000000e+00> : vector<8x1xf32>
    %155 = tpu.matmul %154, %148, %cst_92 {dimension_numbers = #tpu.dot_dimension_numbers<[1], [0], [0], [1], [0, 0, 1, 1], [], []>} : vector<8x32xf32>, vector<32x1xf32>, vector<8x1xf32> -> vector<8x1xf32>
    %cst_93 = arith.constant 3.125000e-02 : f32
    %156 = vector.broadcast %cst_93 : f32 to vector<8x1xf32>
    %157 = arith.mulf %155, %156 : vector<8x1xf32>
    %cst_94 = arith.constant 9.99999974E-6 : f32
    %158 = vector.broadcast %cst_94 : f32 to vector<8x1xf32>
    %159 = arith.addf %157, %158 : vector<8x1xf32>
    %160 = math.rsqrt %159 : vector<8x1xf32>
    %161 = vector.broadcast %160 : vector<8x1xf32> to vector<8x32xf32>
    %162 = arith.mulf %153, %161 : vector<8x32xf32>
    %c0_95 = arith.constant 0 : index
    %c0_96 = arith.constant 0 : index
    %163 = vector.load %arg26[%c0_95, %c0_96] : memref<1x32xf32, #tpu.memory_space<vmem>>, vector<1x32xf32>
    %164 = vector.broadcast %163 : vector<1x32xf32> to vector<8x32xf32>
    %165 = arith.mulf %162, %164 : vector<8x32xf32>
    %c0_97 = arith.constant 0 : index
    %c0_98 = arith.constant 0 : index
    %166 = vector.load %arg27[%c0_97, %c0_98] : memref<1x32xf32, #tpu.memory_space<vmem>>, vector<1x32xf32>
    %167 = vector.broadcast %166 : vector<1x32xf32> to vector<8x32xf32>
    %168 = arith.addf %165, %167 : vector<8x32xf32>
    %cst_99 = arith.constant 0.000000e+00 : f32
    %169 = vector.broadcast %cst_99 : f32 to vector<8x32xf32>
    %170 = arith.maximumf %168, %169 : vector<8x32xf32>
    %c0_100 = arith.constant 0 : index
    %c0_101 = arith.constant 0 : index
    %171 = vector.load %arg28[%c0_100, %c0_101] : memref<12x16xf32, #tpu.memory_space<vmem>>, vector<12x16xf32>
    %cst_102 = arith.constant dense<0.000000e+00> : vector<8x16xf32>
    %172 = tpu.matmul %2, %171, %cst_102 {dimension_numbers = #tpu.dot_dimension_numbers<[1], [0], [0], [1], [0, 0, 1, 1], [], []>} : vector<8x12xf32>, vector<12x16xf32>, vector<8x16xf32> -> vector<8x16xf32>
    %c0_103 = arith.constant 0 : index
    %c0_104 = arith.constant 0 : index
    %173 = vector.load %arg29[%c0_103, %c0_104] : memref<1x16xf32, #tpu.memory_space<vmem>>, vector<1x16xf32>
    %174 = vector.broadcast %173 : vector<1x16xf32> to vector<8x16xf32>
    %175 = arith.addf %172, %174 : vector<8x16xf32>
    %cst_105 = arith.constant 1.000000e+00 : f32
    %176 = vector.broadcast %cst_105 : f32 to vector<16x1xf32>
    %cst_106 = arith.constant dense<0.000000e+00> : vector<8x1xf32>
    %177 = tpu.matmul %175, %176, %cst_106 {dimension_numbers = #tpu.dot_dimension_numbers<[1], [0], [0], [1], [0, 0, 1, 1], [], []>} : vector<8x16xf32>, vector<16x1xf32>, vector<8x1xf32> -> vector<8x1xf32>
    %cst_107 = arith.constant 6.250000e-02 : f32
    %178 = vector.broadcast %cst_107 : f32 to vector<8x1xf32>
    %179 = arith.mulf %177, %178 : vector<8x1xf32>
    %180 = vector.broadcast %179 : vector<8x1xf32> to vector<8x16xf32>
    %181 = arith.subf %175, %180 : vector<8x16xf32>
    %182 = arith.mulf %181, %181 : vector<8x16xf32>
    %cst_108 = arith.constant dense<0.000000e+00> : vector<8x1xf32>
    %183 = tpu.matmul %182, %176, %cst_108 {dimension_numbers = #tpu.dot_dimension_numbers<[1], [0], [0], [1], [0, 0, 1, 1], [], []>} : vector<8x16xf32>, vector<16x1xf32>, vector<8x1xf32> -> vector<8x1xf32>
    %cst_109 = arith.constant 6.250000e-02 : f32
    %184 = vector.broadcast %cst_109 : f32 to vector<8x1xf32>
    %185 = arith.mulf %183, %184 : vector<8x1xf32>
    %cst_110 = arith.constant 9.99999974E-6 : f32
    %186 = vector.broadcast %cst_110 : f32 to vector<8x1xf32>
    %187 = arith.addf %185, %186 : vector<8x1xf32>
    %188 = math.rsqrt %187 : vector<8x1xf32>
    %189 = vector.broadcast %188 : vector<8x1xf32> to vector<8x16xf32>
    %190 = arith.mulf %181, %189 : vector<8x16xf32>
    %c0_111 = arith.constant 0 : index
    %c0_112 = arith.constant 0 : index
    %191 = vector.load %arg30[%c0_111, %c0_112] : memref<1x16xf32, #tpu.memory_space<vmem>>, vector<1x16xf32>
    %192 = vector.broadcast %191 : vector<1x16xf32> to vector<8x16xf32>
    %193 = arith.mulf %190, %192 : vector<8x16xf32>
    %c0_113 = arith.constant 0 : index
    %c0_114 = arith.constant 0 : index
    %194 = vector.load %arg31[%c0_113, %c0_114] : memref<1x16xf32, #tpu.memory_space<vmem>>, vector<1x16xf32>
    %195 = vector.broadcast %194 : vector<1x16xf32> to vector<8x16xf32>
    %196 = arith.addf %193, %195 : vector<8x16xf32>
    %cst_115 = arith.constant 0.000000e+00 : f32
    %197 = vector.broadcast %cst_115 : f32 to vector<8x16xf32>
    %198 = arith.maximumf %196, %197 : vector<8x16xf32>
    %c0_116 = arith.constant 0 : index
    %c0_117 = arith.constant 0 : index
    %199 = vector.load %arg32[%c0_116, %c0_117] : memref<12x32xf32, #tpu.memory_space<vmem>>, vector<12x32xf32>
    %cst_118 = arith.constant dense<0.000000e+00> : vector<8x32xf32>
    %200 = tpu.matmul %2, %199, %cst_118 {dimension_numbers = #tpu.dot_dimension_numbers<[1], [0], [0], [1], [0, 0, 1, 1], [], []>} : vector<8x12xf32>, vector<12x32xf32>, vector<8x32xf32> -> vector<8x32xf32>
    %c0_119 = arith.constant 0 : index
    %c0_120 = arith.constant 0 : index
    %201 = vector.load %arg33[%c0_119, %c0_120] : memref<1x32xf32, #tpu.memory_space<vmem>>, vector<1x32xf32>
    %202 = vector.broadcast %201 : vector<1x32xf32> to vector<8x32xf32>
    %203 = arith.addf %200, %202 : vector<8x32xf32>
    %cst_121 = arith.constant 1.000000e+00 : f32
    %204 = vector.broadcast %cst_121 : f32 to vector<32x1xf32>
    %cst_122 = arith.constant dense<0.000000e+00> : vector<8x1xf32>
    %205 = tpu.matmul %203, %204, %cst_122 {dimension_numbers = #tpu.dot_dimension_numbers<[1], [0], [0], [1], [0, 0, 1, 1], [], []>} : vector<8x32xf32>, vector<32x1xf32>, vector<8x1xf32> -> vector<8x1xf32>
    %cst_123 = arith.constant 3.125000e-02 : f32
    %206 = vector.broadcast %cst_123 : f32 to vector<8x1xf32>
    %207 = arith.mulf %205, %206 : vector<8x1xf32>
    %208 = vector.broadcast %207 : vector<8x1xf32> to vector<8x32xf32>
    %209 = arith.subf %203, %208 : vector<8x32xf32>
    %210 = arith.mulf %209, %209 : vector<8x32xf32>
    %cst_124 = arith.constant dense<0.000000e+00> : vector<8x1xf32>
    %211 = tpu.matmul %210, %204, %cst_124 {dimension_numbers = #tpu.dot_dimension_numbers<[1], [0], [0], [1], [0, 0, 1, 1], [], []>} : vector<8x32xf32>, vector<32x1xf32>, vector<8x1xf32> -> vector<8x1xf32>
    %cst_125 = arith.constant 3.125000e-02 : f32
    %212 = vector.broadcast %cst_125 : f32 to vector<8x1xf32>
    %213 = arith.mulf %211, %212 : vector<8x1xf32>
    %cst_126 = arith.constant 9.99999974E-6 : f32
    %214 = vector.broadcast %cst_126 : f32 to vector<8x1xf32>
    %215 = arith.addf %213, %214 : vector<8x1xf32>
    %216 = math.rsqrt %215 : vector<8x1xf32>
    %217 = vector.broadcast %216 : vector<8x1xf32> to vector<8x32xf32>
    %218 = arith.mulf %209, %217 : vector<8x32xf32>
    %c0_127 = arith.constant 0 : index
    %c0_128 = arith.constant 0 : index
    %219 = vector.load %arg34[%c0_127, %c0_128] : memref<1x32xf32, #tpu.memory_space<vmem>>, vector<1x32xf32>
    %220 = vector.broadcast %219 : vector<1x32xf32> to vector<8x32xf32>
    %221 = arith.mulf %218, %220 : vector<8x32xf32>
    %c0_129 = arith.constant 0 : index
    %c0_130 = arith.constant 0 : index
    %222 = vector.load %arg35[%c0_129, %c0_130] : memref<1x32xf32, #tpu.memory_space<vmem>>, vector<1x32xf32>
    %223 = vector.broadcast %222 : vector<1x32xf32> to vector<8x32xf32>
    %224 = arith.addf %221, %223 : vector<8x32xf32>
    %cst_131 = arith.constant 0.000000e+00 : f32
    %225 = vector.broadcast %cst_131 : f32 to vector<8x32xf32>
    %226 = arith.maximumf %224, %225 : vector<8x32xf32>
    %227 = arith.mulf %58, %114 : vector<8x16xf32>
    %c0_132 = arith.constant 0 : index
    %c0_133 = arith.constant 0 : index
    %228 = vector.load %arg36[%c0_132, %c0_133] : memref<16x32xf32, #tpu.memory_space<vmem>>, vector<16x32xf32>
    %cst_134 = arith.constant dense<0.000000e+00> : vector<8x32xf32>
    %229 = tpu.matmul %227, %228, %cst_134 {dimension_numbers = #tpu.dot_dimension_numbers<[1], [0], [0], [1], [0, 0, 1, 1], [], []>} : vector<8x16xf32>, vector<16x32xf32>, vector<8x32xf32> -> vector<8x32xf32>
    %c0_135 = arith.constant 0 : index
    %c0_136 = arith.constant 0 : index
    %230 = vector.load %arg37[%c0_135, %c0_136] : memref<1x32xf32, #tpu.memory_space<vmem>>, vector<1x32xf32>
    %231 = vector.broadcast %230 : vector<1x32xf32> to vector<8x32xf32>
    %232 = arith.addf %229, %231 : vector<8x32xf32>
    %cst_137 = arith.constant 1.000000e+00 : f32
    %233 = vector.broadcast %cst_137 : f32 to vector<32x1xf32>
    %cst_138 = arith.constant dense<0.000000e+00> : vector<8x1xf32>
    %234 = tpu.matmul %232, %233, %cst_138 {dimension_numbers = #tpu.dot_dimension_numbers<[1], [0], [0], [1], [0, 0, 1, 1], [], []>} : vector<8x32xf32>, vector<32x1xf32>, vector<8x1xf32> -> vector<8x1xf32>
    %cst_139 = arith.constant 3.125000e-02 : f32
    %235 = vector.broadcast %cst_139 : f32 to vector<8x1xf32>
    %236 = arith.mulf %234, %235 : vector<8x1xf32>
    %237 = vector.broadcast %236 : vector<8x1xf32> to vector<8x32xf32>
    %238 = arith.subf %232, %237 : vector<8x32xf32>
    %239 = arith.mulf %238, %238 : vector<8x32xf32>
    %cst_140 = arith.constant dense<0.000000e+00> : vector<8x1xf32>
    %240 = tpu.matmul %239, %233, %cst_140 {dimension_numbers = #tpu.dot_dimension_numbers<[1], [0], [0], [1], [0, 0, 1, 1], [], []>} : vector<8x32xf32>, vector<32x1xf32>, vector<8x1xf32> -> vector<8x1xf32>
    %cst_141 = arith.constant 3.125000e-02 : f32
    %241 = vector.broadcast %cst_141 : f32 to vector<8x1xf32>
    %242 = arith.mulf %240, %241 : vector<8x1xf32>
    %cst_142 = arith.constant 9.99999974E-6 : f32
    %243 = vector.broadcast %cst_142 : f32 to vector<8x1xf32>
    %244 = arith.addf %242, %243 : vector<8x1xf32>
    %245 = math.rsqrt %244 : vector<8x1xf32>
    %246 = vector.broadcast %245 : vector<8x1xf32> to vector<8x32xf32>
    %247 = arith.mulf %238, %246 : vector<8x32xf32>
    %c0_143 = arith.constant 0 : index
    %c0_144 = arith.constant 0 : index
    %248 = vector.load %arg38[%c0_143, %c0_144] : memref<1x32xf32, #tpu.memory_space<vmem>>, vector<1x32xf32>
    %249 = vector.broadcast %248 : vector<1x32xf32> to vector<8x32xf32>
    %250 = arith.mulf %247, %249 : vector<8x32xf32>
    %c0_145 = arith.constant 0 : index
    %c0_146 = arith.constant 0 : index
    %251 = vector.load %arg39[%c0_145, %c0_146] : memref<1x32xf32, #tpu.memory_space<vmem>>, vector<1x32xf32>
    %252 = vector.broadcast %251 : vector<1x32xf32> to vector<8x32xf32>
    %253 = arith.addf %250, %252 : vector<8x32xf32>
    %cst_147 = arith.constant 0.000000e+00 : f32
    %254 = vector.broadcast %cst_147 : f32 to vector<8x32xf32>
    %255 = arith.maximumf %253, %254 : vector<8x32xf32>
    %256 = arith.mulf %30, %86 : vector<8x32xf32>
    %257 = arith.addf %255, %256 : vector<8x32xf32>
    %c0_148 = arith.constant 0 : index
    %c0_149 = arith.constant 0 : index
    %258 = vector.load %arg40[%c0_148, %c0_149] : memref<32x16xf32, #tpu.memory_space<vmem>>, vector<32x16xf32>
    %cst_150 = arith.constant dense<0.000000e+00> : vector<8x16xf32>
    %259 = tpu.matmul %257, %258, %cst_150 {dimension_numbers = #tpu.dot_dimension_numbers<[1], [0], [0], [1], [0, 0, 1, 1], [], []>} : vector<8x32xf32>, vector<32x16xf32>, vector<8x16xf32> -> vector<8x16xf32>
    %c0_151 = arith.constant 0 : index
    %c0_152 = arith.constant 0 : index
    %260 = vector.load %arg41[%c0_151, %c0_152] : memref<1x16xf32, #tpu.memory_space<vmem>>, vector<1x16xf32>
    %261 = vector.broadcast %260 : vector<1x16xf32> to vector<8x16xf32>
    %262 = arith.addf %259, %261 : vector<8x16xf32>
    %263 = arith.mulf %142, %198 : vector<8x16xf32>
    %c0_153 = arith.constant 0 : index
    %c0_154 = arith.constant 0 : index
    %264 = vector.load %arg36[%c0_153, %c0_154] : memref<16x32xf32, #tpu.memory_space<vmem>>, vector<16x32xf32>
    %cst_155 = arith.constant dense<0.000000e+00> : vector<8x32xf32>
    %265 = tpu.matmul %263, %264, %cst_155 {dimension_numbers = #tpu.dot_dimension_numbers<[1], [0], [0], [1], [0, 0, 1, 1], [], []>} : vector<8x16xf32>, vector<16x32xf32>, vector<8x32xf32> -> vector<8x32xf32>
    %c0_156 = arith.constant 0 : index
    %c0_157 = arith.constant 0 : index
    %266 = vector.load %arg37[%c0_156, %c0_157] : memref<1x32xf32, #tpu.memory_space<vmem>>, vector<1x32xf32>
    %267 = vector.broadcast %266 : vector<1x32xf32> to vector<8x32xf32>
    %268 = arith.addf %265, %267 : vector<8x32xf32>
    %cst_158 = arith.constant 1.000000e+00 : f32
    %269 = vector.broadcast %cst_158 : f32 to vector<32x1xf32>
    %cst_159 = arith.constant dense<0.000000e+00> : vector<8x1xf32>
    %270 = tpu.matmul %268, %269, %cst_159 {dimension_numbers = #tpu.dot_dimension_numbers<[1], [0], [0], [1], [0, 0, 1, 1], [], []>} : vector<8x32xf32>, vector<32x1xf32>, vector<8x1xf32> -> vector<8x1xf32>
    %cst_160 = arith.constant 3.125000e-02 : f32
    %271 = vector.broadcast %cst_160 : f32 to vector<8x1xf32>
    %272 = arith.mulf %270, %271 : vector<8x1xf32>
    %273 = vector.broadcast %272 : vector<8x1xf32> to vector<8x32xf32>
    %274 = arith.subf %268, %273 : vector<8x32xf32>
    %275 = arith.mulf %274, %274 : vector<8x32xf32>
    %cst_161 = arith.constant dense<0.000000e+00> : vector<8x1xf32>
    %276 = tpu.matmul %275, %269, %cst_161 {dimension_numbers = #tpu.dot_dimension_numbers<[1], [0], [0], [1], [0, 0, 1, 1], [], []>} : vector<8x32xf32>, vector<32x1xf32>, vector<8x1xf32> -> vector<8x1xf32>
    %cst_162 = arith.constant 3.125000e-02 : f32
    %277 = vector.broadcast %cst_162 : f32 to vector<8x1xf32>
    %278 = arith.mulf %276, %277 : vector<8x1xf32>
    %cst_163 = arith.constant 9.99999974E-6 : f32
    %279 = vector.broadcast %cst_163 : f32 to vector<8x1xf32>
    %280 = arith.addf %278, %279 : vector<8x1xf32>
    %281 = math.rsqrt %280 : vector<8x1xf32>
    %282 = vector.broadcast %281 : vector<8x1xf32> to vector<8x32xf32>
    %283 = arith.mulf %274, %282 : vector<8x32xf32>
    %c0_164 = arith.constant 0 : index
    %c0_165 = arith.constant 0 : index
    %284 = vector.load %arg38[%c0_164, %c0_165] : memref<1x32xf32, #tpu.memory_space<vmem>>, vector<1x32xf32>
    %285 = vector.broadcast %284 : vector<1x32xf32> to vector<8x32xf32>
    %286 = arith.mulf %283, %285 : vector<8x32xf32>
    %c0_166 = arith.constant 0 : index
    %c0_167 = arith.constant 0 : index
    %287 = vector.load %arg39[%c0_166, %c0_167] : memref<1x32xf32, #tpu.memory_space<vmem>>, vector<1x32xf32>
    %288 = vector.broadcast %287 : vector<1x32xf32> to vector<8x32xf32>
    %289 = arith.addf %286, %288 : vector<8x32xf32>
    %cst_168 = arith.constant 0.000000e+00 : f32
    %290 = vector.broadcast %cst_168 : f32 to vector<8x32xf32>
    %291 = arith.maximumf %289, %290 : vector<8x32xf32>
    %292 = arith.mulf %170, %226 : vector<8x32xf32>
    %293 = arith.addf %291, %292 : vector<8x32xf32>
    %c0_169 = arith.constant 0 : index
    %c0_170 = arith.constant 0 : index
    %294 = vector.load %arg40[%c0_169, %c0_170] : memref<32x16xf32, #tpu.memory_space<vmem>>, vector<32x16xf32>
    %cst_171 = arith.constant dense<0.000000e+00> : vector<8x16xf32>
    %295 = tpu.matmul %293, %294, %cst_171 {dimension_numbers = #tpu.dot_dimension_numbers<[1], [0], [0], [1], [0, 0, 1, 1], [], []>} : vector<8x32xf32>, vector<32x16xf32>, vector<8x16xf32> -> vector<8x16xf32>
    %c0_172 = arith.constant 0 : index
    %c0_173 = arith.constant 0 : index
    %296 = vector.load %arg41[%c0_172, %c0_173] : memref<1x16xf32, #tpu.memory_space<vmem>>, vector<1x16xf32>
    %297 = vector.broadcast %296 : vector<1x16xf32> to vector<8x16xf32>
    %298 = arith.addf %295, %297 : vector<8x16xf32>
    %cst_174 = arith.constant 0.000000e+00 : f32
    %299 = vector.broadcast %cst_174 : f32 to vector<8x64xf32>
    %300 = tpu.concatenate %30, %58, %170, %142, %86, %114, %226, %198, %299 in 1 : vector<8x32xf32>, vector<8x16xf32>, vector<8x32xf32>, vector<8x16xf32>, vector<8x32xf32>, vector<8x16xf32>, vector<8x32xf32>, vector<8x16xf32>, vector<8x64xf32> -> vector<8x256xf32>
    %c0_175 = arith.constant 0 : index
    %c0_176 = arith.constant 0 : index
    %301 = vector.load %arg42[%c0_175, %c0_176] : memref<8x256xf32, #tpu.memory_space<vmem>>, vector<8x256xf32>
    tpu.vector_store %arg42[%c0_175, %c0_176], %300 {strides = array<i32>} : memref<8x256xf32, #tpu.memory_space<vmem>>, vector<8x256xf32>,
    %c0_177 = arith.constant 0 : index
    %c0_178 = arith.constant 0 : index
    %302 = vector.load %arg43[%c0_177, %c0_178] : memref<8x16xf32, #tpu.memory_space<vmem>>, vector<8x16xf32>
    tpu.vector_store %arg43[%c0_177, %c0_178], %262 {strides = array<i32>} : memref<8x16xf32, #tpu.memory_space<vmem>>, vector<8x16xf32>,
    %c0_179 = arith.constant 0 : index
    %c0_180 = arith.constant 0 : index
    %303 = vector.load %arg44[%c0_179, %c0_180] : memref<8x16xf32, #tpu.memory_space<vmem>>, vector<8x16xf32>
    tpu.vector_store %arg44[%c0_179, %c0_180], %298 {strides = array<i32>} : memref<8x16xf32, #tpu.memory_space<vmem>>, vector<8x16xf32>,
    return
  }
  func.func @transform_0(%arg0: i32) -> (i32, i32) {
    %c0_i32 = arith.constant 0 : i32
    %c0_i32_0 = arith.constant 0 : i32
    return %arg0, %c0_i32 : i32, i32
  }
  func.func @transform_1(%arg0: i32) -> (i32, i32) {
    %c0_i32 = arith.constant 0 : i32
    %c0_i32_0 = arith.constant 0 : i32
    return %arg0, %c0_i32 : i32, i32
  }
  func.func @transform_2(%arg0: i32) -> (i32, i32) {
    %c0_i32 = arith.constant 0 : i32
    %c0_i32_0 = arith.constant 0 : i32
    return %arg0, %c0_i32 : i32, i32
  }
  func.func @transform_3(%arg0: i32) -> (i32, i32) {
    %c0_i32 = arith.constant 0 : i32
    %c0_i32_0 = arith.constant 0 : i32
    %c0_i32_1 = arith.constant 0 : i32
    return %c0_i32, %c0_i32_0 : i32, i32
  }
  func.func @transform_4(%arg0: i32) -> (i32, i32) {
    %c0_i32 = arith.constant 0 : i32
    %c0_i32_0 = arith.constant 0 : i32
    %c0_i32_1 = arith.constant 0 : i32
    return %c0_i32, %c0_i32_0 : i32, i32
  }
  func.func @transform_5(%arg0: i32) -> (i32, i32) {
    %c0_i32 = arith.constant 0 : i32
    %c0_i32_0 = arith.constant 0 : i32
    %c0_i32_1 = arith.constant 0 : i32
    return %c0_i32, %c0_i32_0 : i32, i32
  }
  func.func @transform_6(%arg0: i32) -> (i32, i32) {
    %c0_i32 = arith.constant 0 : i32
    %c0_i32_0 = arith.constant 0 : i32
    %c0_i32_1 = arith.constant 0 : i32
    return %c0_i32, %c0_i32_0 : i32, i32
  }
  func.func @transform_7(%arg0: i32) -> (i32, i32) {
    %c0_i32 = arith.constant 0 : i32
    %c0_i32_0 = arith.constant 0 : i32
    %c0_i32_1 = arith.constant 0 : i32
    return %c0_i32, %c0_i32_0 : i32, i32
  }
  func.func @transform_8(%arg0: i32) -> (i32, i32) {
    %c0_i32 = arith.constant 0 : i32
    %c0_i32_0 = arith.constant 0 : i32
    %c0_i32_1 = arith.constant 0 : i32
    return %c0_i32, %c0_i32_0 : i32, i32
  }
  func.func @transform_9(%arg0: i32) -> (i32, i32) {
    %c0_i32 = arith.constant 0 : i32
    %c0_i32_0 = arith.constant 0 : i32
    %c0_i32_1 = arith.constant 0 : i32
    return %c0_i32, %c0_i32_0 : i32, i32
  }
  func.func @transform_10(%arg0: i32) -> (i32, i32) {
    %c0_i32 = arith.constant 0 : i32
    %c0_i32_0 = arith.constant 0 : i32
    %c0_i32_1 = arith.constant 0 : i32
    return %c0_i32, %c0_i32_0 : i32, i32
  }
  func.func @transform_11(%arg0: i32) -> (i32, i32) {
    %c0_i32 = arith.constant 0 : i32
    %c0_i32_0 = arith.constant 0 : i32
    %c0_i32_1 = arith.constant 0 : i32
    return %c0_i32, %c0_i32_0 : i32, i32
  }
  func.func @transform_12(%arg0: i32) -> (i32, i32) {
    %c0_i32 = arith.constant 0 : i32
    %c0_i32_0 = arith.constant 0 : i32
    %c0_i32_1 = arith.constant 0 : i32
    return %c0_i32, %c0_i32_0 : i32, i32
  }
  func.func @transform_13(%arg0: i32) -> (i32, i32) {
    %c0_i32 = arith.constant 0 : i32
    %c0_i32_0 = arith.constant 0 : i32
    %c0_i32_1 = arith.constant 0 : i32
    return %c0_i32, %c0_i32_0 : i32, i32
  }
  func.func @transform_14(%arg0: i32) -> (i32, i32) {
    %c0_i32 = arith.constant 0 : i32
    %c0_i32_0 = arith.constant 0 : i32
    %c0_i32_1 = arith.constant 0 : i32
    return %c0_i32, %c0_i32_0 : i32, i32
  }
  func.func @transform_15(%arg0: i32) -> (i32, i32) {
    %c0_i32 = arith.constant 0 : i32
    %c0_i32_0 = arith.constant 0 : i32
    %c0_i32_1 = arith.constant 0 : i32
    return %c0_i32, %c0_i32_0 : i32, i32
  }
  func.func @transform_16(%arg0: i32) -> (i32, i32) {
    %c0_i32 = arith.constant 0 : i32
    %c0_i32_0 = arith.constant 0 : i32
    %c0_i32_1 = arith.constant 0 : i32
    return %c0_i32, %c0_i32_0 : i32, i32
  }
  func.func @transform_17(%arg0: i32) -> (i32, i32) {
    %c0_i32 = arith.constant 0 : i32
    %c0_i32_0 = arith.constant 0 : i32
    %c0_i32_1 = arith.constant 0 : i32
    return %c0_i32, %c0_i32_0 : i32, i32
  }
  func.func @transform_18(%arg0: i32) -> (i32, i32) {
    %c0_i32 = arith.constant 0 : i32
    %c0_i32_0 = arith.constant 0 : i32
    %c0_i32_1 = arith.constant 0 : i32
    return %c0_i32, %c0_i32_0 : i32, i32
  }
  func.func @transform_19(%arg0: i32) -> (i32, i32) {
    %c0_i32 = arith.constant 0 : i32
    %c0_i32_0 = arith.constant 0 : i32
    %c0_i32_1 = arith.constant 0 : i32
    return %c0_i32, %c0_i32_0 : i32, i32
  }
  func.func @transform_20(%arg0: i32) -> (i32, i32) {
    %c0_i32 = arith.constant 0 : i32
    %c0_i32_0 = arith.constant 0 : i32
    %c0_i32_1 = arith.constant 0 : i32
    return %c0_i32, %c0_i32_0 : i32, i32
  }
  func.func @transform_21(%arg0: i32) -> (i32, i32) {
    %c0_i32 = arith.constant 0 : i32
    %c0_i32_0 = arith.constant 0 : i32
    %c0_i32_1 = arith.constant 0 : i32
    return %c0_i32, %c0_i32_0 : i32, i32
  }
  func.func @transform_22(%arg0: i32) -> (i32, i32) {
    %c0_i32 = arith.constant 0 : i32
    %c0_i32_0 = arith.constant 0 : i32
    %c0_i32_1 = arith.constant 0 : i32
    return %c0_i32, %c0_i32_0 : i32, i32
  }
  func.func @transform_23(%arg0: i32) -> (i32, i32) {
    %c0_i32 = arith.constant 0 : i32
    %c0_i32_0 = arith.constant 0 : i32
    %c0_i32_1 = arith.constant 0 : i32
    return %c0_i32, %c0_i32_0 : i32, i32
  }
  func.func @transform_24(%arg0: i32) -> (i32, i32) {
    %c0_i32 = arith.constant 0 : i32
    %c0_i32_0 = arith.constant 0 : i32
    %c0_i32_1 = arith.constant 0 : i32
    return %c0_i32, %c0_i32_0 : i32, i32
  }
  func.func @transform_25(%arg0: i32) -> (i32, i32) {
    %c0_i32 = arith.constant 0 : i32
    %c0_i32_0 = arith.constant 0 : i32
    %c0_i32_1 = arith.constant 0 : i32
    return %c0_i32, %c0_i32_0 : i32, i32
  }
  func.func @transform_26(%arg0: i32) -> (i32, i32) {
    %c0_i32 = arith.constant 0 : i32
    %c0_i32_0 = arith.constant 0 : i32
    %c0_i32_1 = arith.constant 0 : i32
    return %c0_i32, %c0_i32_0 : i32, i32
  }
  func.func @transform_27(%arg0: i32) -> (i32, i32) {
    %c0_i32 = arith.constant 0 : i32
    %c0_i32_0 = arith.constant 0 : i32
    %c0_i32_1 = arith.constant 0 : i32
    return %c0_i32, %c0_i32_0 : i32, i32
  }
  func.func @transform_28(%arg0: i32) -> (i32, i32) {
    %c0_i32 = arith.constant 0 : i32
    %c0_i32_0 = arith.constant 0 : i32
    %c0_i32_1 = arith.constant 0 : i32
    return %c0_i32, %c0_i32_0 : i32, i32
  }
  func.func @transform_29(%arg0: i32) -> (i32, i32) {
    %c0_i32 = arith.constant 0 : i32
    %c0_i32_0 = arith.constant 0 : i32
    %c0_i32_1 = arith.constant 0 : i32
    return %c0_i32, %c0_i32_0 : i32, i32
  }
  func.func @transform_30(%arg0: i32) -> (i32, i32) {
    %c0_i32 = arith.constant 0 : i32
    %c0_i32_0 = arith.constant 0 : i32
    %c0_i32_1 = arith.constant 0 : i32
    return %c0_i32, %c0_i32_0 : i32, i32
  }
  func.func @transform_31(%arg0: i32) -> (i32, i32) {
    %c0_i32 = arith.constant 0 : i32
    %c0_i32_0 = arith.constant 0 : i32
    %c0_i32_1 = arith.constant 0 : i32
    return %c0_i32, %c0_i32_0 : i32, i32
  }
  func.func @transform_32(%arg0: i32) -> (i32, i32) {
    %c0_i32 = arith.constant 0 : i32
    %c0_i32_0 = arith.constant 0 : i32
    %c0_i32_1 = arith.constant 0 : i32
    return %c0_i32, %c0_i32_0 : i32, i32
  }
  func.func @transform_33(%arg0: i32) -> (i32, i32) {
    %c0_i32 = arith.constant 0 : i32
    %c0_i32_0 = arith.constant 0 : i32
    %c0_i32_1 = arith.constant 0 : i32
    return %c0_i32, %c0_i32_0 : i32, i32
  }
  func.func @transform_34(%arg0: i32) -> (i32, i32) {
    %c0_i32 = arith.constant 0 : i32
    %c0_i32_0 = arith.constant 0 : i32
    %c0_i32_1 = arith.constant 0 : i32
    return %c0_i32, %c0_i32_0 : i32, i32
  }
  func.func @transform_35(%arg0: i32) -> (i32, i32) {
    %c0_i32 = arith.constant 0 : i32
    %c0_i32_0 = arith.constant 0 : i32
    %c0_i32_1 = arith.constant 0 : i32
    return %c0_i32, %c0_i32_0 : i32, i32
  }
  func.func @transform_36(%arg0: i32) -> (i32, i32) {
    %c0_i32 = arith.constant 0 : i32
    %c0_i32_0 = arith.constant 0 : i32
    %c0_i32_1 = arith.constant 0 : i32
    return %c0_i32, %c0_i32_0 : i32, i32
  }
  func.func @transform_37(%arg0: i32) -> (i32, i32) {
    %c0_i32 = arith.constant 0 : i32
    %c0_i32_0 = arith.constant 0 : i32
    %c0_i32_1 = arith.constant 0 : i32
    return %c0_i32, %c0_i32_0 : i32, i32
  }
  func.func @transform_38(%arg0: i32) -> (i32, i32) {
    %c0_i32 = arith.constant 0 : i32
    %c0_i32_0 = arith.constant 0 : i32
    %c0_i32_1 = arith.constant 0 : i32
    return %c0_i32, %c0_i32_0 : i32, i32
  }
  func.func @transform_39(%arg0: i32) -> (i32, i32) {
    %c0_i32 = arith.constant 0 : i32
    %c0_i32_0 = arith.constant 0 : i32
    %c0_i32_1 = arith.constant 0 : i32
    return %c0_i32, %c0_i32_0 : i32, i32
  }
  func.func @transform_40(%arg0: i32) -> (i32, i32) {
    %c0_i32 = arith.constant 0 : i32
    %c0_i32_0 = arith.constant 0 : i32
    %c0_i32_1 = arith.constant 0 : i32
    return %c0_i32, %c0_i32_0 : i32, i32
  }
  func.func @transform_41(%arg0: i32) -> (i32, i32) {
    %c0_i32 = arith.constant 0 : i32
    %c0_i32_0 = arith.constant 0 : i32
    return %arg0, %c0_i32 : i32, i32
  }
  func.func @transform_42(%arg0: i32) -> (i32, i32) {
    %c0_i32 = arith.constant 0 : i32
    %c0_i32_0 = arith.constant 0 : i32
    return %arg0, %c0_i32 : i32, i32
  }
  func.func @transform_43(%arg0: i32) -> (i32, i32) {
    %c0_i32 = arith.constant 0 : i32
    %c0_i32_0 = arith.constant 0 : i32
    return %arg0, %c0_i32 : i32, i32
  }
}

</mosaic_0001>

<llo_original>
// kernel: tpu_custom_call.1
$region0: #{tpu_custom_call.1}
  #allocation0 [shape = 'u32[]', space=smem, size = 0x4, offset = 0x4, fixed_abs, tag = 'smem constant byte address 0x4 - core index']
  #allocation1 [shape = 'u32[72,128]{1,0:T(1,128)}', space=vmem, size = 0x9000, scoped, tag = 'internal scratch']
  %s0 = inlined_call_operand.smem [shape: u32[44], index: -1, kind: input, shape index: {}]
  %s1 = sld [smem:[%s0]]
  %s2 = scalar_lea.smem %s0, 1
  %s3 = sld [smem:[%s2]]
  %s4 = scalar_lea.smem %s0, 2
  %s5 = sld [smem:[%s4]]
  %s6 = scalar_lea.smem %s0, 3
  %s7 = sld [smem:[%s6]]
  %s8 = scalar_lea.smem %s0, 4
  %s9 = sld [smem:[%s8]]
  %s10 = scalar_lea.smem %s0, 5
  %s11 = sld [smem:[%s10]]
  %s12 = scalar_lea.smem %s0, 6
  %s13 = sld [smem:[%s12]]
  %s14 = scalar_lea.smem %s0, 7
  %s15 = sld [smem:[%s14]]
  %s16 = scalar_lea.smem %s0, 8
  %s17 = sld [smem:[%s16]]
  %s18 = scalar_lea.smem %s0, 9
  %s19 = sld [smem:[%s18]]
  %s20 = scalar_lea.smem %s0, 10
  %s21 = sld [smem:[%s20]]
  %s22 = scalar_lea.smem %s0, 11
  %s23 = sld [smem:[%s22]]
  %s24 = scalar_lea.smem %s0, 12
  %s25 = sld [smem:[%s24]]
  %s26 = scalar_lea.smem %s0, 13
  %s27 = sld [smem:[%s26]]
  %s28 = scalar_lea.smem %s0, 14
  %s29 = sld [smem:[%s28]]
  %s30 = scalar_lea.smem %s0, 15
  %s31 = sld [smem:[%s30]]
  %s32 = scalar_lea.smem %s0, 16
  %s33 = sld [smem:[%s32]]
  %s34 = scalar_lea.smem %s0, 17
  %s35 = sld [smem:[%s34]]
  %s36 = scalar_lea.smem %s0, 18
  %s37 = sld [smem:[%s36]]
  %s38 = scalar_lea.smem %s0, 19
  %s39 = sld [smem:[%s38]]
  %s40 = scalar_lea.smem %s0, 20
  %s41 = sld [smem:[%s40]]
  %s42 = scalar_lea.smem %s0, 21
  %s43 = sld [smem:[%s42]]
  %s44 = scalar_lea.smem %s0, 22
  %s45 = sld [smem:[%s44]]
  %s46 = scalar_lea.smem %s0, 23
  %s47 = sld [smem:[%s46]]
  %s48 = scalar_lea.smem %s0, 24
  %s49 = sld [smem:[%s48]]
  %s50 = scalar_lea.smem %s0, 25
  %s51 = sld [smem:[%s50]]
  %s52 = scalar_lea.smem %s0, 26
  %s53 = sld [smem:[%s52]]
  %s54 = scalar_lea.smem %s0, 27
  %s55 = sld [smem:[%s54]]
  %s56 = scalar_lea.smem %s0, 28
  %s57 = sld [smem:[%s56]]
  %s58 = scalar_lea.smem %s0, 29
  %s59 = sld [smem:[%s58]]
  %s60 = scalar_lea.smem %s0, 30
  %s61 = sld [smem:[%s60]]
  %s62 = scalar_lea.smem %s0, 31
  %s63 = sld [smem:[%s62]]
  %s64 = scalar_lea.smem %s0, 32
  %s65 = sld [smem:[%s64]]
  %s66 = scalar_lea.smem %s0, 33
  %s67 = sld [smem:[%s66]]
  %s68 = scalar_lea.smem %s0, 34
  %s69 = sld [smem:[%s68]]
  %s70 = scalar_lea.smem %s0, 35
  %s71 = sld [smem:[%s70]]
  %s72 = scalar_lea.smem %s0, 36
  %s73 = sld [smem:[%s72]]
  %s74 = scalar_lea.smem %s0, 37
  %s75 = sld [smem:[%s74]]
  %s76 = scalar_lea.smem %s0, 38
  %s77 = sld [smem:[%s76]]
  %s78 = scalar_lea.smem %s0, 39
  %s79 = sld [smem:[%s78]]
  %s80 = scalar_lea.smem %s0, 40
  %s81 = sld [smem:[%s80]]
  %s82 = scalar_lea.smem %s0, 41
  %s83 = sld [smem:[%s82]]
  %s84 = scalar_lea.smem %s0, 42
  %s85 = sld [smem:[%s84]]
  %s86 = scalar_lea.smem %s0, 43
  %s87 = sld [smem:[%s86]]
  %88 = xla_tuple %s83, %s85, %s87
  %s89 = sld [smem:[#allocation0]]
  $region194: #{tpu_custom_call.1} parent=0
    _
  %s91 = ssub.s32 1, %s89
  %s92 = scalar_select 0, %s91, %s89
  $region1: #{tpu_custom_call.1} parent=0
    #allocation2 [shape = 'u8[512]{0}', space=vmem, size = 0x400, scoped, tag = 'input window, operand 40, single buffered']
    #allocation3 [shape = 's32[1]{0}', space=sflag, size = 0x4, scoped, tag = 'scoped memory for tpu_custom_call.1']
    #allocation4 [shape = 's32[1]{0}', space=sflag, size = 0x4, scoped, tag = 'scoped memory for tpu_custom_call.1']
    #allocation5 [shape = 'u8[8192]{0}', space=vmem, size = 0x2000, scoped, tag = 'output window, operand 0, single buffered']
    #allocation6 [shape = 'u8[4096]{0}', space=vmem, size = 0x1000, scoped, tag = 'output window, operand 1, single buffered']
    #allocation7 [shape = 's32[1]{0}', space=sflag, size = 0x4, scoped, tag = 'scoped memory for tpu_custom_call.1']
    #allocation8 [shape = 'u8[4096]{0}', space=vmem, size = 0x1000, scoped, tag = 'output window, operand 2, single buffered']
    %93 = vsyncpa [#allocation3], 0
    %94 = vsyncpa [#allocation4], 0
    %95 = vsyncpa [#allocation7], 0
    // Predicated region
    $region2: #{tpu_custom_call.1} parent=1 // pred_check
      _
    $region3: #{tpu_custom_call.1} parent=1 // pred_check_branch
      %97 = sbr.rel (0) target = $region5
    $region4: #{tpu_custom_call.1} parent=1 // pred_region
      _
    $region5: #{tpu_custom_call.1} parent=1 // pred_fallthru
      _
    // Predicated region
    $region6: #{tpu_custom_call.1} parent=1 // pred_check
      _
    $region7: #{tpu_custom_call.1} parent=1 // pred_check_branch
      %99 = sbr.rel (0) target = $region9
    $region8: #{tpu_custom_call.1} parent=1 // pred_region
      _
    $region9: #{tpu_custom_call.1} parent=1 // pred_fallthru
      _
    // Predicated region
    $region10: #{tpu_custom_call.1} parent=1 // pred_check
      _
    $region11: #{tpu_custom_call.1} parent=1 // pred_check_branch
      %101 = sbr.rel (0) target = $region13
    $region12: #{tpu_custom_call.1} parent=1 // pred_region
      _
    $region13: #{tpu_custom_call.1} parent=1 // pred_fallthru
      _
    // Predicated region
    $region14: #{tpu_custom_call.1} parent=1 // pred_check
      _
    $region15: #{tpu_custom_call.1} parent=1 // pred_check_branch
      %103 = sbr.rel (0) target = $region17
    $region16: #{tpu_custom_call.1} parent=1 // pred_region
      _
    $region17: #{tpu_custom_call.1} parent=1 // pred_fallthru
      _
    // Predicated region
    $region18: #{tpu_custom_call.1} parent=1 // pred_check
      _
    $region19: #{tpu_custom_call.1} parent=1 // pred_check_branch
      %105 = sbr.rel (0) target = $region21
    $region20: #{tpu_custom_call.1} parent=1 // pred_region
      _
    $region21: #{tpu_custom_call.1} parent=1 // pred_fallthru
      _
    // Predicated region
    $region22: #{tpu_custom_call.1} parent=1 // pred_check
      _
    $region23: #{tpu_custom_call.1} parent=1 // pred_check_branch
      %107 = sbr.rel (0) target = $region25
    $region24: #{tpu_custom_call.1} parent=1 // pred_region
      _
    $region25: #{tpu_custom_call.1} parent=1 // pred_fallthru
      _
    // Predicated region
    $region26: #{tpu_custom_call.1} parent=1 // pred_check
      _
    $region27: #{tpu_custom_call.1} parent=1 // pred_check_branch
      %109 = sbr.rel (0) target = $region29
    $region28: #{tpu_custom_call.1} parent=1 // pred_region
      _
    $region29: #{tpu_custom_call.1} parent=1 // pred_fallthru
      _
    // Predicated region
    $region30: #{tpu_custom_call.1} parent=1 // pred_check
      _
    $region31: #{tpu_custom_call.1} parent=1 // pred_check_branch
      %111 = sbr.rel (0) target = $region33
    $region32: #{tpu_custom_call.1} parent=1 // pred_region
      _
    $region33: #{tpu_custom_call.1} parent=1 // pred_fallthru
      _
    // Predicated region
    $region34: #{tpu_custom_call.1} parent=1 // pred_check
      _
    $region35: #{tpu_custom_call.1} parent=1 // pred_check_branch
      %113 = sbr.rel (0) target = $region37
    $region36: #{tpu_custom_call.1} parent=1 // pred_region
      _
    $region37: #{tpu_custom_call.1} parent=1 // pred_fallthru
      _
    // Predicated region
    $region38: #{tpu_custom_call.1} parent=1 // pred_check
      _
    $region39: #{tpu_custom_call.1} parent=1 // pred_check_branch
      %115 = sbr.rel (0) target = $region41
    $region40: #{tpu_custom_call.1} parent=1 // pred_region
      _
    $region41: #{tpu_custom_call.1} parent=1 // pred_fallthru
      _
    // Predicated region
    $region42: #{tpu_custom_call.1} parent=1 // pred_check
      _
    $region43: #{tpu_custom_call.1} parent=1 // pred_check_branch
      %117 = sbr.rel (0) target = $region45
    $region44: #{tpu_custom_call.1} parent=1 // pred_region
      _
    $region45: #{tpu_custom_call.1} parent=1 // pred_fallthru
      _
    // Predicated region
    $region46: #{tpu_custom_call.1} parent=1 // pred_check
      _
    $region47: #{tpu_custom_call.1} parent=1 // pred_check_branch
      %119 = sbr.rel (0) target = $region49
    $region48: #{tpu_custom_call.1} parent=1 // pred_region
      _
    $region49: #{tpu_custom_call.1} parent=1 // pred_fallthru
      _
    // Predicated region
    $region50: #{tpu_custom_call.1} parent=1 // pred_check
      _
    $region51: #{tpu_custom_call.1} parent=1 // pred_check_branch
      %121 = sbr.rel (0) target = $region53
    $region52: #{tpu_custom_call.1} parent=1 // pred_region
      _
    $region53: #{tpu_custom_call.1} parent=1 // pred_fallthru
      _
    // Predicated region
    $region54: #{tpu_custom_call.1} parent=1 // pred_check
      _
    $region55: #{tpu_custom_call.1} parent=1 // pred_check_branch
      %123 = sbr.rel (0) target = $region57
    $region56: #{tpu_custom_call.1} parent=1 // pred_region
      _
    $region57: #{tpu_custom_call.1} parent=1 // pred_fallthru
      _
    // Predicated region
    $region58: #{tpu_custom_call.1} parent=1 // pred_check
      _
    $region59: #{tpu_custom_call.1} parent=1 // pred_check_branch
      %125 = sbr.rel (0) target = $region61
    $region60: #{tpu_custom_call.1} parent=1 // pred_region
      _
    $region61: #{tpu_custom_call.1} parent=1 // pred_fallthru
      _
    // Predicated region
    $region62: #{tpu_custom_call.1} parent=1 // pred_check
      _
    $region63: #{tpu_custom_call.1} parent=1 // pred_check_branch
      %127 = sbr.rel (0) target = $region65
    $region64: #{tpu_custom_call.1} parent=1 // pred_region
      _
    $region65: #{tpu_custom_call.1} parent=1 // pred_fallthru
      _
    // Predicated region
    $region66: #{tpu_custom_call.1} parent=1 // pred_check
      _
    $region67: #{tpu_custom_call.1} parent=1 // pred_check_branch
      %129 = sbr.rel (0) target = $region69
    $region68: #{tpu_custom_call.1} parent=1 // pred_region
      _
    $region69: #{tpu_custom_call.1} parent=1 // pred_fallthru
      _
    // Predicated region
    $region70: #{tpu_custom_call.1} parent=1 // pred_check
      _
    $region71: #{tpu_custom_call.1} parent=1 // pred_check_branch
      %131 = sbr.rel (0) target = $region73
    $region72: #{tpu_custom_call.1} parent=1 // pred_region
      _
    $region73: #{tpu_custom_call.1} parent=1 // pred_fallthru
      _
    // Predicated region
    $region74: #{tpu_custom_call.1} parent=1 // pred_check
      _
    $region75: #{tpu_custom_call.1} parent=1 // pred_check_branch
      %133 = sbr.rel (0) target = $region77
    $region76: #{tpu_custom_call.1} parent=1 // pred_region
      _
    $region77: #{tpu_custom_call.1} parent=1 // pred_fallthru
      _
    // Predicated region
    $region78: #{tpu_custom_call.1} parent=1 // pred_check
      _
    $region79: #{tpu_custom_call.1} parent=1 // pred_check_branch
      %135 = sbr.rel (0) target = $region81
    $region80: #{tpu_custom_call.1} parent=1 // pred_region
      _
    $region81: #{tpu_custom_call.1} parent=1 // pred_fallthru
      _
    // Predicated region
    $region82: #{tpu_custom_call.1} parent=1 // pred_check
      _
    $region83: #{tpu_custom_call.1} parent=1 // pred_check_branch
      %137 = sbr.rel (0) target = $region85
    $region84: #{tpu_custom_call.1} parent=1 // pred_region
      _
    $region85: #{tpu_custom_call.1} parent=1 // pred_fallthru
      _
    // Predicated region
    $region86: #{tpu_custom_call.1} parent=1 // pred_check
      _
    $region87: #{tpu_custom_call.1} parent=1 // pred_check_branch
      %139 = sbr.rel (0) target = $region89
    $region88: #{tpu_custom_call.1} parent=1 // pred_region
      _
    $region89: #{tpu_custom_call.1} parent=1 // pred_fallthru
      _
    // Predicated region
    $region90: #{tpu_custom_call.1} parent=1 // pred_check
      _
    $region91: #{tpu_custom_call.1} parent=1 // pred_check_branch
      %141 = sbr.rel (0) target = $region93
    $region92: #{tpu_custom_call.1} parent=1 // pred_region
      _
    $region93: #{tpu_custom_call.1} parent=1 // pred_fallthru
      _
    // Predicated region
    $region94: #{tpu_custom_call.1} parent=1 // pred_check
      _
    $region95: #{tpu_custom_call.1} parent=1 // pred_check_branch
      %143 = sbr.rel (0) target = $region97
    $region96: #{tpu_custom_call.1} parent=1 // pred_region
      _
    $region97: #{tpu_custom_call.1} parent=1 // pred_fallthru
      _
    // Predicated region
    $region98: #{tpu_custom_call.1} parent=1 // pred_check
      _
    $region99: #{tpu_custom_call.1} parent=1 // pred_check_branch
      %145 = sbr.rel (0) target = $region101
    $region100: #{tpu_custom_call.1} parent=1 // pred_region
      _
    $region101: #{tpu_custom_call.1} parent=1 // pred_fallthru
      _
    // Predicated region
    $region102: #{tpu_custom_call.1} parent=1 // pred_check
      _
    $region103: #{tpu_custom_call.1} parent=1 // pred_check_branch
      %147 = sbr.rel (0) target = $region105
    $region104: #{tpu_custom_call.1} parent=1 // pred_region
      _
    $region105: #{tpu_custom_call.1} parent=1 // pred_fallthru
      _
    // Predicated region
    $region106: #{tpu_custom_call.1} parent=1 // pred_check
      _
    $region107: #{tpu_custom_call.1} parent=1 // pred_check_branch
      %149 = sbr.rel (0) target = $region109
    $region108: #{tpu_custom_call.1} parent=1 // pred_region
      _
    $region109: #{tpu_custom_call.1} parent=1 // pred_fallthru
      _
    // Predicated region
    $region110: #{tpu_custom_call.1} parent=1 // pred_check
      _
    $region111: #{tpu_custom_call.1} parent=1 // pred_check_branch
      %151 = sbr.rel (0) target = $region113
    $region112: #{tpu_custom_call.1} parent=1 // pred_region
      _
    $region113: #{tpu_custom_call.1} parent=1 // pred_fallthru
      _
    // Predicated region
    $region114: #{tpu_custom_call.1} parent=1 // pred_check
      _
    $region115: #{tpu_custom_call.1} parent=1 // pred_check_branch
      %153 = sbr.rel (0) target = $region117
    $region116: #{tpu_custom_call.1} parent=1 // pred_region
      _
    $region117: #{tpu_custom_call.1} parent=1 // pred_fallthru
      _
    // Predicated region
    $region118: #{tpu_custom_call.1} parent=1 // pred_check
      _
    $region119: #{tpu_custom_call.1} parent=1 // pred_check_branch
      %155 = sbr.rel (0) target = $region121
    $region120: #{tpu_custom_call.1} parent=1 // pred_region
      _
    $region121: #{tpu_custom_call.1} parent=1 // pred_fallthru
      _
    // Predicated region
    $region122: #{tpu_custom_call.1} parent=1 // pred_check
      _
    $region123: #{tpu_custom_call.1} parent=1 // pred_check_branch
      %157 = sbr.rel (0) target = $region125
    $region124: #{tpu_custom_call.1} parent=1 // pred_region
      _
    $region125: #{tpu_custom_call.1} parent=1 // pred_fallthru
      _
    // Predicated region
    $region126: #{tpu_custom_call.1} parent=1 // pred_check
      _
    $region127: #{tpu_custom_call.1} parent=1 // pred_check_branch
      %159 = sbr.rel (0) target = $region129
    $region128: #{tpu_custom_call.1} parent=1 // pred_region
      _
    $region129: #{tpu_custom_call.1} parent=1 // pred_fallthru
      _
    // Predicated region
    $region130: #{tpu_custom_call.1} parent=1 // pred_check
      _
    $region131: #{tpu_custom_call.1} parent=1 // pred_check_branch
      %161 = sbr.rel (0) target = $region133
    $region132: #{tpu_custom_call.1} parent=1 // pred_region
      _
    $region133: #{tpu_custom_call.1} parent=1 // pred_fallthru
      _
    // Predicated region
    $region134: #{tpu_custom_call.1} parent=1 // pred_check
      _
    $region135: #{tpu_custom_call.1} parent=1 // pred_check_branch
      %163 = sbr.rel (0) target = $region137
    $region136: #{tpu_custom_call.1} parent=1 // pred_region
      _
    $region137: #{tpu_custom_call.1} parent=1 // pred_fallthru
      _
    // Predicated region
    $region138: #{tpu_custom_call.1} parent=1 // pred_check
      _
    $region139: #{tpu_custom_call.1} parent=1 // pred_check_branch
      %165 = sbr.rel (0) target = $region141
    $region140: #{tpu_custom_call.1} parent=1 // pred_region
      _
    $region141: #{tpu_custom_call.1} parent=1 // pred_fallthru
      _
    // Predicated region
    $region142: #{tpu_custom_call.1} parent=1 // pred_check
      _
    $region143: #{tpu_custom_call.1} parent=1 // pred_check_branch
      %167 = sbr.rel (0) target = $region145
    $region144: #{tpu_custom_call.1} parent=1 // pred_region
      _
    $region145: #{tpu_custom_call.1} parent=1 // pred_fallthru
      _
    // Predicated region
    $region146: #{tpu_custom_call.1} parent=1 // pred_check
      _
    $region147: #{tpu_custom_call.1} parent=1 // pred_check_branch
      %169 = sbr.rel (0) target = $region149
    $region148: #{tpu_custom_call.1} parent=1 // pred_region
      _
    $region149: #{tpu_custom_call.1} parent=1 // pred_fallthru
      _
    // Predicated region
    $region150: #{tpu_custom_call.1} parent=1 // pred_check
      _
    $region151: #{tpu_custom_call.1} parent=1 // pred_check_branch
      %171 = sbr.rel (0) target = $region153
    $region152: #{tpu_custom_call.1} parent=1 // pred_region
      _
    $region153: #{tpu_custom_call.1} parent=1 // pred_fallthru
      _
    // Predicated region
    $region154: #{tpu_custom_call.1} parent=1 // pred_check
      _
    $region155: #{tpu_custom_call.1} parent=1 // pred_check_branch
      %173 = sbr.rel (0) target = $region157
    $region156: #{tpu_custom_call.1} parent=1 // pred_region
      _
    $region157: #{tpu_custom_call.1} parent=1 // pred_fallthru
      _
    // Predicated region
    $region158: #{tpu_custom_call.1} parent=1 // pred_check
      _
    $region159: #{tpu_custom_call.1} parent=1 // pred_check_branch
      %175 = sbr.rel (0) target = $region161
    $region160: #{tpu_custom_call.1} parent=1 // pred_region
      _
    $region161: #{tpu_custom_call.1} parent=1 // pred_fallthru
      _
    // Predicated region
    $region162: #{tpu_custom_call.1} parent=1 // pred_check
      _
    $region163: #{tpu_custom_call.1} parent=1 // pred_check_branch
      %177 = sbr.rel (0) target = $region165
    $region164: #{tpu_custom_call.1} parent=1 // pred_region
      %179 = vsyncadd [#allocation3], 0
      %s181 = sshll.u32 %s81, 4
      %s182 = int_to_ptr.hbm [resolvable:$true] %s181
      %s183 = sshll.u32 [#allocation2], 4
      %s184 = int_to_ptr.vmem [resolvable:$true] %s183
      %186 = dma.hbm_to_vmem [thread:$0]  %s182, 16, %s184, [#allocation3]
    $region165: #{tpu_custom_call.1} parent=1 // pred_fallthru
      _
    // Predicated region
    $region166: #{tpu_custom_call.1} parent=1 // pred_check
      _
    $region167: #{tpu_custom_call.1} parent=1 // pred_check_branch
      %188 = sbr.rel (0) target = $region169
    $region168: #{tpu_custom_call.1} parent=1 // pred_region
      %190 = dma.done [#allocation3], 16
    $region169: #{tpu_custom_call.1} parent=1 // pred_fallthru
      _
    %v191 = vld [vmem:[%s1] sm:$0xff]
    %v192 = vld [vmem:[%s3] sm:$0xff]
    %v193 = vld [vmem:[%s5] sm:$0xff]
    %v194 = vld [vmem:[%s7] sm:$0xff]
    %v195 = vld [vmem:[%s7 + $0x8] sm:$0xff]
    %v196 = vld [vmem:[%s9] sm:$0x1]
    %v198 = vperm.slane %v196, 0
    %vm200 = vcmask 130048
    %v202 = vsel %vm200, %v192, 0
    %204 = vmatpush.msra.mxu0 0.0
    %205 = vmatpush.msra.mxu0 0.0
    %206 = vmatpush.msra.mxu0 0.0
    %207 = vmatpush.msra.mxu0 0.0
    %208 = vmatpush.msra.mxu0 0.0
    %209 = vmatpush.msra.mxu0 0.0
    %210 = vmatpush.msra.mxu0 0.0
    %211 = vmatpush.msra.mxu0 0.0
    %212 = vmatpush.msra.mxu0 0.0
    %213 = vmatpush.msra.mxu0 0.0
    %214 = vmatpush.msra.mxu0 0.0
    %215 = vmatpush.msra.mxu0 0.0
    %216 = vmatpush.msra.mxu0 0.0
    %217 = vmatpush.msra.mxu0 0.0
    %218 = vmatpush.msra.mxu0 %v195
    %219 = vmatpush.msra.mxu0 %v194
    %220 = vmatmul.f32.gmra.mxu0 %v202
    %v221 = vpop.f32.mrf.mxu0
    %v222 = vadd.f32 %v198, %v221
    %223 = vdwg.mxu0
    %vm224 = vcmask 261120
    %v226 = vsel %vm224, %v222, 0
    %228 = vmatpush.msra.mxu0 0.0
    %229 = vmatpush.msra.mxu0 0.0
    %230 = vmatpush.msra.mxu0 0.0
    %231 = vmatpush.msra.mxu0 0.0
    %232 = vmatpush.msra.mxu0 0.0
    %233 = vmatpush.msra.mxu0 0.0
    %234 = vmatpush.msra.mxu0 0.0
    %235 = vmatpush.msra.mxu0 0.0
    %236 = vmatpush.msra.mxu0 0.0
    %237 = vmatpush.msra.mxu0 0.0
    %238 = vmatpush.msra.mxu0 0.0
    %239 = vmatpush.msra.mxu0 0.0
    %240 = vmatpush.msra.mxu0 1.0
    %241 = vmatpush.msra.mxu0 1.0
    %242 = vmatpush.msra.mxu0 1.0
    %243 = vmatpush.msra.mxu0 1.0
    %244 = vmatmul.f32.gmra.mxu0 %v226
    %v245 = vpop.f32.mrf.mxu0
    %v246 = vadd.f32 0.0, %v245
    %247 = vdwg.mxu0
    %v248 = vmul.f32 %v246, 0.03125
    %250 = vset.pattern.permute.xlu0 0
    %251 = vperm.xlu0 %250, %v248
    %v252 = vpop.permute.xlu0 %251
    %v254 = vsub.f32 %v222, %v252
    %v255 = vmul.f32 %v254, %v254
    %v257 = vsel %vm224, %v255, 0
    %259 = vmatpush.msra.mxu0 0.0
    %260 = vmatpush.msra.mxu0 0.0
    %261 = vmatpush.msra.mxu0 0.0
    %262 = vmatpush.msra.mxu0 0.0
    %263 = vmatpush.msra.mxu0 0.0
    %264 = vmatpush.msra.mxu0 0.0
    %265 = vmatpush.msra.mxu0 0.0
    %266 = vmatpush.msra.mxu0 0.0
    %267 = vmatpush.msra.mxu0 0.0
    %268 = vmatpush.msra.mxu0 0.0
    %269 = vmatpush.msra.mxu0 0.0
    %270 = vmatpush.msra.mxu0 0.0
    %271 = vmatpush.msra.mxu0 1.0
    %272 = vmatpush.msra.mxu0 1.0
    %273 = vmatpush.msra.mxu0 1.0
    %274 = vmatpush.msra.mxu0 1.0
    %275 = vmatmul.f32.gmra.mxu0 %v257
    %v276 = vpop.f32.mrf.mxu0
    %v277 = vadd.f32 0.0, %v276
    %278 = vdwg.mxu0
    %v279 = vmul.f32 %v277, 0.03125
    %v280 = vadd.f32 %v279, 1e-05
    %v281 = vrsqrt.pop %v280
    %v282 = vmul.f32 %v281, %v280
    %v283 = vmul.f32 %v282, %v281
    %v284 = vmul.f32 0.5, %v283
    %v285 = vsub.f32 1.5, %v284
    %v286 = vmul.f32 %v281, %v285
    %vm287 = vweird.f32 %v280
    %vm288 = vweird.f32 %v281
    %vm289 = vmor %vm287, %vm288
    %v290 = vsel %vm289, %v281, %v286
    %292 = vset.pattern.permute.xlu0 0
    %293 = vperm.xlu0 %292, %v290
    %v294 = vpop.permute.xlu0 %293
    %v296 = vmul.f32 %v254, %v294
    %v297 = vld [vmem:[%s11] sm:$0x1]
    %v299 = vperm.slane %v297, 0
    %v301 = vmul.f32 %v296, %v299
    %v302 = vld [vmem:[%s13] sm:$0x1]
    %v304 = vperm.slane %v302, 0
    %v306 = vadd.f32 %v301, %v304
    %v307 = vmax.f32 %v306, 0.0
    %v308 = vld [vmem:[%s15] sm:$0xff]
    %v309 = vld [vmem:[%s15 + $0x8] sm:$0xff]
    %v310 = vld [vmem:[%s15 + $0x10] sm:$0xff]
    %v311 = vld [vmem:[%s15 + $0x18] sm:$0xff]
    %v312 = vld [vmem:[%s17] sm:$0x1]
    %v314 = vperm.slane %v312, 0
    %v317 = vsel %vm224, %v307, 0
    %319 = vmatpush.msra.mxu0 0.0
    %320 = vmatpush.msra.mxu0 0.0
    %321 = vmatpush.msra.mxu0 0.0
    %322 = vmatpush.msra.mxu0 0.0
    %323 = vmatpush.msra.mxu0 0.0
    %324 = vmatpush.msra.mxu0 0.0
    %325 = vmatpush.msra.mxu0 0.0
    %326 = vmatpush.msra.mxu0 0.0
    %327 = vmatpush.msra.mxu0 0.0
    %328 = vmatpush.msra.mxu0 0.0
    %329 = vmatpush.msra.mxu0 0.0
    %330 = vmatpush.msra.mxu0 0.0
    %331 = vmatpush.msra.mxu0 %v311
    %332 = vmatpush.msra.mxu0 %v310
    %333 = vmatpush.msra.mxu0 %v309
    %334 = vmatpush.msra.mxu0 %v308
    %335 = vmatmul.f32.gmra.mxu0 %v317
    %v336 = vpop.f32.mrf.mxu0
    %v337 = vadd.f32 %v314, %v336
    %338 = vdwg.mxu0
    %v340 = vsel %vm200, %v337, 0
    %342 = vmatpush.msra.mxu0 0.0
    %343 = vmatpush.msra.mxu0 0.0
    %344 = vmatpush.msra.mxu0 0.0
    %345 = vmatpush.msra.mxu0 0.0
    %346 = vmatpush.msra.mxu0 0.0
    %347 = vmatpush.msra.mxu0 0.0
    %348 = vmatpush.msra.mxu0 0.0
    %349 = vmatpush.msra.mxu0 0.0
    %350 = vmatpush.msra.mxu0 0.0
    %351 = vmatpush.msra.mxu0 0.0
    %352 = vmatpush.msra.mxu0 0.0
    %353 = vmatpush.msra.mxu0 0.0
    %354 = vmatpush.msra.mxu0 0.0
    %355 = vmatpush.msra.mxu0 0.0
    %356 = vmatpush.msra.mxu0 1.0
    %357 = vmatpush.msra.mxu0 1.0
    %358 = vmatmul.f32.gmra.mxu0 %v340
    %v359 = vpop.f32.mrf.mxu0
    %v360 = vadd.f32 0.0, %v359
    %361 = vdwg.mxu0
    %v362 = vmul.f32 %v360, 0.0625
    %364 = vset.pattern.permute.xlu0 0
    %365 = vperm.xlu0 %364, %v362
    %v366 = vpop.permute.xlu0 %365
    %v368 = vsub.f32 %v337, %v366
    %v369 = vmul.f32 %v368, %v368
    %v371 = vsel %vm200, %v369, 0
    %373 = vmatpush.msra.mxu0 0.0
    %374 = vmatpush.msra.mxu0 0.0
    %375 = vmatpush.msra.mxu0 0.0
    %376 = vmatpush.msra.mxu0 0.0
    %377 = vmatpush.msra.mxu0 0.0
    %378 = vmatpush.msra.mxu0 0.0
    %379 = vmatpush.msra.mxu0 0.0
    %380 = vmatpush.msra.mxu0 0.0
    %381 = vmatpush.msra.mxu0 0.0
    %382 = vmatpush.msra.mxu0 0.0
    %383 = vmatpush.msra.mxu0 0.0
    %384 = vmatpush.msra.mxu0 0.0
    %385 = vmatpush.msra.mxu0 0.0
    %386 = vmatpush.msra.mxu0 0.0
    %387 = vmatpush.msra.mxu0 1.0
    %388 = vmatpush.msra.mxu0 1.0
    %389 = vmatmul.f32.gmra.mxu0 %v371
    %v390 = vpop.f32.mrf.mxu0
    %v391 = vadd.f32 0.0, %v390
    %392 = vdwg.mxu0
    %v393 = vmul.f32 %v391, 0.0625
    %v394 = vadd.f32 %v393, 1e-05
    %v395 = vrsqrt.pop %v394
    %v396 = vmul.f32 %v395, %v394
    %v397 = vmul.f32 %v396, %v395
    %v398 = vmul.f32 0.5, %v397
    %v399 = vsub.f32 1.5, %v398
    %v400 = vmul.f32 %v395, %v399
    %vm401 = vweird.f32 %v394
    %vm402 = vweird.f32 %v395
    %vm403 = vmor %vm401, %vm402
    %v404 = vsel %vm403, %v395, %v400
    %406 = vset.pattern.permute.xlu0 0
    %407 = vperm.xlu0 %406, %v404
    %v408 = vpop.permute.xlu0 %407
    %v410 = vmul.f32 %v368, %v408
    %v411 = vld [vmem:[%s19] sm:$0x1]
    %v413 = vperm.slane %v411, 0
    %v415 = vmul.f32 %v410, %v413
    %v416 = vld [vmem:[%s21] sm:$0x1]
    %v418 = vperm.slane %v416, 0
    %v420 = vadd.f32 %v415, %v418
    %v421 = vmax.f32 %v420, 0.0
    %v422 = vld [vmem:[%s23] sm:$0xff]
    %v423 = vld [vmem:[%s23 + $0x8] sm:$0xff]
    %v424 = vld [vmem:[%s25] sm:$0x1]
    %v426 = vperm.slane %v424, 0
    %428 = vmatpush.msra.mxu0 0.0
    %429 = vmatpush.msra.mxu0 0.0
    %430 = vmatpush.msra.mxu0 0.0
    %431 = vmatpush.msra.mxu0 0.0
    %432 = vmatpush.msra.mxu0 0.0
    %433 = vmatpush.msra.mxu0 0.0
    %434 = vmatpush.msra.mxu0 0.0
    %435 = vmatpush.msra.mxu0 0.0
    %436 = vmatpush.msra.mxu0 0.0
    %437 = vmatpush.msra.mxu0 0.0
    %438 = vmatpush.msra.mxu0 0.0
    %439 = vmatpush.msra.mxu0 0.0
    %440 = vmatpush.msra.mxu0 0.0
    %441 = vmatpush.msra.mxu0 0.0
    %442 = vmatpush.msra.mxu0 %v423
    %443 = vmatpush.msra.mxu0 %v422
    %444 = vmatmul.f32.gmra.mxu0 %v202
    %v445 = vpop.f32.mrf.mxu0
    %v446 = vadd.f32 %v426, %v445
    %447 = vdwg.mxu0
    %v449 = vsel %vm224, %v446, 0
    %451 = vmatpush.msra.mxu0 0.0
    %452 = vmatpush.msra.mxu0 0.0
    %453 = vmatpush.msra.mxu0 0.0
    %454 = vmatpush.msra.mxu0 0.0
    %455 = vmatpush.msra.mxu0 0.0
    %456 = vmatpush.msra.mxu0 0.0
    %457 = vmatpush.msra.mxu0 0.0
    %458 = vmatpush.msra.mxu0 0.0
    %459 = vmatpush.msra.mxu0 0.0
    %460 = vmatpush.msra.mxu0 0.0
    %461 = vmatpush.msra.mxu0 0.0
    %462 = vmatpush.msra.mxu0 0.0
    %463 = vmatpush.msra.mxu0 1.0
    %464 = vmatpush.msra.mxu0 1.0
    %465 = vmatpush.msra.mxu0 1.0
    %466 = vmatpush.msra.mxu0 1.0
    %467 = vmatmul.f32.gmra.mxu0 %v449
    %v468 = vpop.f32.mrf.mxu0
    %v469 = vadd.f32 0.0, %v468
    %470 = vdwg.mxu0
    %v471 = vmul.f32 %v469, 0.03125
    %473 = vset.pattern.permute.xlu0 0
    %474 = vperm.xlu0 %473, %v471
    %v475 = vpop.permute.xlu0 %474
    %v477 = vsub.f32 %v446, %v475
    %v478 = vmul.f32 %v477, %v477
    %v480 = vsel %vm224, %v478, 0
    %482 = vmatpush.msra.mxu0 0.0
    %483 = vmatpush.msra.mxu0 0.0
    %484 = vmatpush.msra.mxu0 0.0
    %485 = vmatpush.msra.mxu0 0.0
    %486 = vmatpush.msra.mxu0 0.0
    %487 = vmatpush.msra.mxu0 0.0
    %488 = vmatpush.msra.mxu0 0.0
    %489 = vmatpush.msra.mxu0 0.0
    %490 = vmatpush.msra.mxu0 0.0
    %491 = vmatpush.msra.mxu0 0.0
    %492 = vmatpush.msra.mxu0 0.0
    %493 = vmatpush.msra.mxu0 0.0
    %494 = vmatpush.msra.mxu0 1.0
    %495 = vmatpush.msra.mxu0 1.0
    %496 = vmatpush.msra.mxu0 1.0
    %497 = vmatpush.msra.mxu0 1.0
    %498 = vmatmul.f32.gmra.mxu0 %v480
    %v499 = vpop.f32.mrf.mxu0
    %v500 = vadd.f32 0.0, %v499
    %501 = vdwg.mxu0
    %v502 = vmul.f32 %v500, 0.03125
    %v503 = vadd.f32 %v502, 1e-05
    %v504 = vrsqrt.pop %v503
    %v505 = vmul.f32 %v504, %v503
    %v506 = vmul.f32 %v505, %v504
    %v507 = vmul.f32 0.5, %v506
    %v508 = vsub.f32 1.5, %v507
    %v509 = vmul.f32 %v504, %v508
    %vm510 = vweird.f32 %v503
    %vm511 = vweird.f32 %v504
    %vm512 = vmor %vm510, %vm511
    %v513 = vsel %vm512, %v504, %v509
    %515 = vset.pattern.permute.xlu0 0
    %516 = vperm.xlu0 %515, %v513
    %v517 = vpop.permute.xlu0 %516
    %v519 = vmul.f32 %v477, %v517
    %v520 = vld [vmem:[%s27] sm:$0x1]
    %v522 = vperm.slane %v520, 0
    %v524 = vmul.f32 %v519, %v522
    %v525 = vld [vmem:[%s29] sm:$0x1]
    %v527 = vperm.slane %v525, 0
    %v529 = vadd.f32 %v524, %v527
    %v530 = vmax.f32 %v529, 0.0
    %v531 = vld [vmem:[%s31] sm:$0xff]
    %v532 = vld [vmem:[%s31 + $0x8] sm:$0xff]
    %v533 = vld [vmem:[%s31 + $0x10] sm:$0xff]
    %v534 = vld [vmem:[%s31 + $0x18] sm:$0xff]
    %v535 = vld [vmem:[%s33] sm:$0x1]
    %v537 = vperm.slane %v535, 0
    %v540 = vsel %vm224, %v530, 0
    %542 = vmatpush.msra.mxu0 0.0
    %543 = vmatpush.msra.mxu0 0.0
    %544 = vmatpush.msra.mxu0 0.0
    %545 = vmatpush.msra.mxu0 0.0
    %546 = vmatpush.msra.mxu0 0.0
    %547 = vmatpush.msra.mxu0 0.0
    %548 = vmatpush.msra.mxu0 0.0
    %549 = vmatpush.msra.mxu0 0.0
    %550 = vmatpush.msra.mxu0 0.0
    %551 = vmatpush.msra.mxu0 0.0
    %552 = vmatpush.msra.mxu0 0.0
    %553 = vmatpush.msra.mxu0 0.0
    %554 = vmatpush.msra.mxu0 %v534
    %555 = vmatpush.msra.mxu0 %v533
    %556 = vmatpush.msra.mxu0 %v532
    %557 = vmatpush.msra.mxu0 %v531
    %558 = vmatmul.f32.gmra.mxu0 %v540
    %v559 = vpop.f32.mrf.mxu0
    %v560 = vadd.f32 %v537, %v559
    %561 = vdwg.mxu0
    %v563 = vsel %vm200, %v560, 0
    %565 = vmatpush.msra.mxu0 0.0
    %566 = vmatpush.msra.mxu0 0.0
    %567 = vmatpush.msra.mxu0 0.0
    %568 = vmatpush.msra.mxu0 0.0
    %569 = vmatpush.msra.mxu0 0.0
    %570 = vmatpush.msra.mxu0 0.0
    %571 = vmatpush.msra.mxu0 0.0
    %572 = vmatpush.msra.mxu0 0.0
    %573 = vmatpush.msra.mxu0 0.0
    %574 = vmatpush.msra.mxu0 0.0
    %575 = vmatpush.msra.mxu0 0.0
    %576 = vmatpush.msra.mxu0 0.0
    %577 = vmatpush.msra.mxu0 0.0
    %578 = vmatpush.msra.mxu0 0.0
    %579 = vmatpush.msra.mxu0 1.0
    %580 = vmatpush.msra.mxu0 1.0
    %581 = vmatmul.f32.gmra.mxu0 %v563
    %v582 = vpop.f32.mrf.mxu0
    %v583 = vadd.f32 0.0, %v582
    %584 = vdwg.mxu0
    %v585 = vmul.f32 %v583, 0.0625
    %587 = vset.pattern.permute.xlu0 0
    %588 = vperm.xlu0 %587, %v585
    %v589 = vpop.permute.xlu0 %588
    %v591 = vsub.f32 %v560, %v589
    %v592 = vmul.f32 %v591, %v591
    %v594 = vsel %vm200, %v592, 0
    %596 = vmatpush.msra.mxu0 0.0
    %597 = vmatpush.msra.mxu0 0.0
    %598 = vmatpush.msra.mxu0 0.0
    %599 = vmatpush.msra.mxu0 0.0
    %600 = vmatpush.msra.mxu0 0.0
    %601 = vmatpush.msra.mxu0 0.0
    %602 = vmatpush.msra.mxu0 0.0
    %603 = vmatpush.msra.mxu0 0.0
    %604 = vmatpush.msra.mxu0 0.0
    %605 = vmatpush.msra.mxu0 0.0
    %606 = vmatpush.msra.mxu0 0.0
    %607 = vmatpush.msra.mxu0 0.0
    %608 = vmatpush.msra.mxu0 0.0
    %609 = vmatpush.msra.mxu0 0.0
    %610 = vmatpush.msra.mxu0 1.0
    %611 = vmatpush.msra.mxu0 1.0
    %612 = vmatmul.f32.gmra.mxu0 %v594
    %v613 = vpop.f32.mrf.mxu0
    %v614 = vadd.f32 0.0, %v613
    %615 = vdwg.mxu0
    %v616 = vmul.f32 %v614, 0.0625
    %v617 = vadd.f32 %v616, 1e-05
    %v618 = vrsqrt.pop %v617
    %v619 = vmul.f32 %v618, %v617
    %v620 = vmul.f32 %v619, %v618
    %v621 = vmul.f32 0.5, %v620
    %v622 = vsub.f32 1.5, %v621
    %v623 = vmul.f32 %v618, %v622
    %vm624 = vweird.f32 %v617
    %vm625 = vweird.f32 %v618
    %vm626 = vmor %vm624, %vm625
    %v627 = vsel %vm626, %v618, %v623
    %629 = vset.pattern.permute.xlu0 0
    %630 = vperm.xlu0 %629, %v627
    %v631 = vpop.permute.xlu0 %630
    %v633 = vmul.f32 %v591, %v631
    %v634 = vld [vmem:[%s35] sm:$0x1]
    %v636 = vperm.slane %v634, 0
    %v638 = vmul.f32 %v633, %v636
    %v639 = vld [vmem:[%s37] sm:$0x1]
    %v641 = vperm.slane %v639, 0
    %v643 = vadd.f32 %v638, %v641
    %v644 = vmax.f32 %v643, 0.0
    %v645 = vld [vmem:[%s39] sm:$0xff]
    %v646 = vld [vmem:[%s39 + $0x8] sm:$0xff]
    %v647 = vld [vmem:[%s39 + $0x10] sm:$0xff]
    %v648 = vld [vmem:[%s41] sm:$0x1]
    %v650 = vperm.slane %v648, 0
    %vm652 = vcmask 195584
    %v654 = vsel %vm652, %v191, 0
    %656 = vmatpush.msra.mxu0 0.0
    %657 = vmatpush.msra.mxu0 0.0
    %658 = vmatpush.msra.mxu0 0.0
    %659 = vmatpush.msra.mxu0 0.0
    %660 = vmatpush.msra.mxu0 0.0
    %661 = vmatpush.msra.mxu0 0.0
    %662 = vmatpush.msra.mxu0 0.0
    %663 = vmatpush.msra.mxu0 0.0
    %664 = vmatpush.msra.mxu0 0.0
    %665 = vmatpush.msra.mxu0 0.0
    %666 = vmatpush.msra.mxu0 0.0
    %667 = vmatpush.msra.mxu0 0.0
    %668 = vmatpush.msra.mxu0 0.0
    %669 = vmatpush.msra.mxu0 %v647
    %670 = vmatpush.msra.mxu0 %v646
    %671 = vmatpush.msra.mxu0 %v645
    %672 = vmatmul.f32.gmra.mxu0 %v654
    %v673 = vpop.f32.mrf.mxu0
    %v674 = vadd.f32 %v650, %v673
    %675 = vdwg.mxu0
    %v677 = vsel %vm200, %v674, 0
    %679 = vmatpush.msra.mxu0 0.0
    %680 = vmatpush.msra.mxu0 0.0
    %681 = vmatpush.msra.mxu0 0.0
    %682 = vmatpush.msra.mxu0 0.0
    %683 = vmatpush.msra.mxu0 0.0
    %684 = vmatpush.msra.mxu0 0.0
    %685 = vmatpush.msra.mxu0 0.0
    %686 = vmatpush.msra.mxu0 0.0
    %687 = vmatpush.msra.mxu0 0.0
    %688 = vmatpush.msra.mxu0 0.0
    %689 = vmatpush.msra.mxu0 0.0
    %690 = vmatpush.msra.mxu0 0.0
    %691 = vmatpush.msra.mxu0 0.0
    %692 = vmatpush.msra.mxu0 0.0
    %693 = vmatpush.msra.mxu0 1.0
    %694 = vmatpush.msra.mxu0 1.0
    %695 = vmatmul.f32.gmra.mxu0 %v677
    %v696 = vpop.f32.mrf.mxu0
    %v697 = vadd.f32 0.0, %v696
    %698 = vdwg.mxu0
    %v699 = vmul.f32 %v697, 0.0625
    %701 = vset.pattern.permute.xlu0 0
    %702 = vperm.xlu0 %701, %v699
    %v703 = vpop.permute.xlu0 %702
    %v705 = vsub.f32 %v674, %v703
    %v706 = vmul.f32 %v705, %v705
    %v708 = vsel %vm200, %v706, 0
    %710 = vmatpush.msra.mxu0 0.0
    %711 = vmatpush.msra.mxu0 0.0
    %712 = vmatpush.msra.mxu0 0.0
    %713 = vmatpush.msra.mxu0 0.0
    %714 = vmatpush.msra.mxu0 0.0
    %715 = vmatpush.msra.mxu0 0.0
    %716 = vmatpush.msra.mxu0 0.0
    %717 = vmatpush.msra.mxu0 0.0
    %718 = vmatpush.msra.mxu0 0.0
    %719 = vmatpush.msra.mxu0 0.0
    %720 = vmatpush.msra.mxu0 0.0
    %721 = vmatpush.msra.mxu0 0.0
    %722 = vmatpush.msra.mxu0 0.0
    %723 = vmatpush.msra.mxu0 0.0
    %724 = vmatpush.msra.mxu0 1.0
    %725 = vmatpush.msra.mxu0 1.0
    %726 = vmatmul.f32.gmra.mxu0 %v708
    %v727 = vpop.f32.mrf.mxu0
    %v728 = vadd.f32 0.0, %v727
    %729 = vdwg.mxu0
    %v730 = vmul.f32 %v728, 0.0625
    %v731 = vadd.f32 %v730, 1e-05
    %v732 = vrsqrt.pop %v731
    %v733 = vmul.f32 %v732, %v731
    %v734 = vmul.f32 %v733, %v732
    %v735 = vmul.f32 0.5, %v734
    %v736 = vsub.f32 1.5, %v735
    %v737 = vmul.f32 %v732, %v736
    %vm738 = vweird.f32 %v731
    %vm739 = vweird.f32 %v732
    %vm740 = vmor %vm738, %vm739
    %v741 = vsel %vm740, %v732, %v737
    %743 = vset.pattern.permute.xlu0 0
    %744 = vperm.xlu0 %743, %v741
    %v745 = vpop.permute.xlu0 %744
    %v747 = vmul.f32 %v705, %v745
    %v748 = vld [vmem:[%s43] sm:$0x1]
    %v750 = vperm.slane %v748, 0
    %v752 = vmul.f32 %v747, %v750
    %v753 = vld [vmem:[%s45] sm:$0x1]
    %v755 = vperm.slane %v753, 0
    %v757 = vadd.f32 %v752, %v755
    %v758 = vmax.f32 %v757, 0.0
    %v759 = vld [vmem:[%s47] sm:$0xff]
    %v760 = vld [vmem:[%s47 + $0x8] sm:$0xff]
    %v761 = vld [vmem:[%s49] sm:$0x1]
    %v763 = vperm.slane %v761, 0
    %v766 = vsel %vm200, %v758, 0
    %768 = vmatpush.msra.mxu0 0.0
    %769 = vmatpush.msra.mxu0 0.0
    %770 = vmatpush.msra.mxu0 0.0
    %771 = vmatpush.msra.mxu0 0.0
    %772 = vmatpush.msra.mxu0 0.0
    %773 = vmatpush.msra.mxu0 0.0
    %774 = vmatpush.msra.mxu0 0.0
    %775 = vmatpush.msra.mxu0 0.0
    %776 = vmatpush.msra.mxu0 0.0
    %777 = vmatpush.msra.mxu0 0.0
    %778 = vmatpush.msra.mxu0 0.0
    %779 = vmatpush.msra.mxu0 0.0
    %780 = vmatpush.msra.mxu0 0.0
    %781 = vmatpush.msra.mxu0 0.0
    %782 = vmatpush.msra.mxu0 %v760
    %783 = vmatpush.msra.mxu0 %v759
    %784 = vmatmul.f32.gmra.mxu0 %v766
    %v785 = vpop.f32.mrf.mxu0
    %v786 = vadd.f32 %v763, %v785
    %787 = vdwg.mxu0
    %v789 = vsel %vm224, %v786, 0
    %791 = vmatpush.msra.mxu0 0.0
    %792 = vmatpush.msra.mxu0 0.0
    %793 = vmatpush.msra.mxu0 0.0
    %794 = vmatpush.msra.mxu0 0.0
    %795 = vmatpush.msra.mxu0 0.0
    %796 = vmatpush.msra.mxu0 0.0
    %797 = vmatpush.msra.mxu0 0.0
    %798 = vmatpush.msra.mxu0 0.0
    %799 = vmatpush.msra.mxu0 0.0
    %800 = vmatpush.msra.mxu0 0.0
    %801 = vmatpush.msra.mxu0 0.0
    %802 = vmatpush.msra.mxu0 0.0
    %803 = vmatpush.msra.mxu0 1.0
    %804 = vmatpush.msra.mxu0 1.0
    %805 = vmatpush.msra.mxu0 1.0
    %806 = vmatpush.msra.mxu0 1.0
    %807 = vmatmul.f32.gmra.mxu0 %v789
    %v808 = vpop.f32.mrf.mxu0
    %v809 = vadd.f32 0.0, %v808
    %810 = vdwg.mxu0
    %v811 = vmul.f32 %v809, 0.03125
    %813 = vset.pattern.permute.xlu0 0
    %814 = vperm.xlu0 %813, %v811
    %v815 = vpop.permute.xlu0 %814
    %v817 = vsub.f32 %v786, %v815
    %v818 = vmul.f32 %v817, %v817
    %v820 = vsel %vm224, %v818, 0
    %822 = vmatpush.msra.mxu0 0.0
    %823 = vmatpush.msra.mxu0 0.0
    %824 = vmatpush.msra.mxu0 0.0
    %825 = vmatpush.msra.mxu0 0.0
    %826 = vmatpush.msra.mxu0 0.0
    %827 = vmatpush.msra.mxu0 0.0
    %828 = vmatpush.msra.mxu0 0.0
    %829 = vmatpush.msra.mxu0 0.0
    %830 = vmatpush.msra.mxu0 0.0
    %831 = vmatpush.msra.mxu0 0.0
    %832 = vmatpush.msra.mxu0 0.0
    %833 = vmatpush.msra.mxu0 0.0
    %834 = vmatpush.msra.mxu0 1.0
    %835 = vmatpush.msra.mxu0 1.0
    %836 = vmatpush.msra.mxu0 1.0
    %837 = vmatpush.msra.mxu0 1.0
    %838 = vmatmul.f32.gmra.mxu0 %v820
    %v839 = vpop.f32.mrf.mxu0
    %v840 = vadd.f32 0.0, %v839
    %841 = vdwg.mxu0
    %v842 = vmul.f32 %v840, 0.03125
    %v843 = vadd.f32 %v842, 1e-05
    %v844 = vrsqrt.pop %v843
    %v845 = vmul.f32 %v844, %v843
    %v846 = vmul.f32 %v845, %v844
    %v847 = vmul.f32 0.5, %v846
    %v848 = vsub.f32 1.5, %v847
    %v849 = vmul.f32 %v844, %v848
    %vm850 = vweird.f32 %v843
    %vm851 = vweird.f32 %v844
    %vm852 = vmor %vm850, %vm851
    %v853 = vsel %vm852, %v844, %v849
    %855 = vset.pattern.permute.xlu0 0
    %856 = vperm.xlu0 %855, %v853
    %v857 = vpop.permute.xlu0 %856
    %v859 = vmul.f32 %v817, %v857
    %v860 = vld [vmem:[%s51] sm:$0x1]
    %v862 = vperm.slane %v860, 0
    %v864 = vmul.f32 %v859, %v862
    %v865 = vld [vmem:[%s53] sm:$0x1]
    %v867 = vperm.slane %v865, 0
    %v869 = vadd.f32 %v864, %v867
    %v870 = vmax.f32 %v869, 0.0
    %v871 = vld [vmem:[%s55] sm:$0xff]
    %v872 = vld [vmem:[%s55 + $0x8] sm:$0xf]
    %v873 = vld [vmem:[%s57] sm:$0x1]
    %v875 = vperm.slane %v873, 0
    %vm877 = vcmask 97280
    %v879 = vsel %vm877, %v193, 0
    %vm881 = vcmask 1043456
    %v883 = vsel %vm881, %v872, 0
    %885 = vmatpush.msra.mxu0 0.0
    %886 = vmatpush.msra.mxu0 0.0
    %887 = vmatpush.msra.mxu0 0.0
    %888 = vmatpush.msra.mxu0 0.0
    %889 = vmatpush.msra.mxu0 0.0
    %890 = vmatpush.msra.mxu0 0.0
    %891 = vmatpush.msra.mxu0 0.0
    %892 = vmatpush.msra.mxu0 0.0
    %893 = vmatpush.msra.mxu0 0.0
    %894 = vmatpush.msra.mxu0 0.0
    %895 = vmatpush.msra.mxu0 0.0
    %896 = vmatpush.msra.mxu0 0.0
    %897 = vmatpush.msra.mxu0 0.0
    %898 = vmatpush.msra.mxu0 0.0
    %899 = vmatpush.msra.mxu0 %v883
    %900 = vmatpush.msra.mxu0 %v871
    %901 = vmatmul.f32.gmra.mxu0 %v879
    %v902 = vpop.f32.mrf.mxu0
    %v903 = vadd.f32 %v875, %v902
    %904 = vdwg.mxu0
    %v906 = vsel %vm200, %v903, 0
    %908 = vmatpush.msra.mxu0 0.0
    %909 = vmatpush.msra.mxu0 0.0
    %910 = vmatpush.msra.mxu0 0.0
    %911 = vmatpush.msra.mxu0 0.0
    %912 = vmatpush.msra.mxu0 0.0
    %913 = vmatpush.msra.mxu0 0.0
    %914 = vmatpush.msra.mxu0 0.0
    %915 = vmatpush.msra.mxu0 0.0
    %916 = vmatpush.msra.mxu0 0.0
    %917 = vmatpush.msra.mxu0 0.0
    %918 = vmatpush.msra.mxu0 0.0
    %919 = vmatpush.msra.mxu0 0.0
    %920 = vmatpush.msra.mxu0 0.0
    %921 = vmatpush.msra.mxu0 0.0
    %922 = vmatpush.msra.mxu0 1.0
    %923 = vmatpush.msra.mxu0 1.0
    %924 = vmatmul.f32.gmra.mxu0 %v906
    %v925 = vpop.f32.mrf.mxu0
    %v926 = vadd.f32 0.0, %v925
    %927 = vdwg.mxu0
    %v928 = vmul.f32 %v926, 0.0625
    %930 = vset.pattern.permute.xlu0 0
    %931 = vperm.xlu0 %930, %v928
    %v932 = vpop.permute.xlu0 %931
    %v934 = vsub.f32 %v903, %v932
    %v935 = vmul.f32 %v934, %v934
    %v937 = vsel %vm200, %v935, 0
    %939 = vmatpush.msra.mxu0 0.0
    %940 = vmatpush.msra.mxu0 0.0
    %941 = vmatpush.msra.mxu0 0.0
    %942 = vmatpush.msra.mxu0 0.0
    %943 = vmatpush.msra.mxu0 0.0
    %944 = vmatpush.msra.mxu0 0.0
    %945 = vmatpush.msra.mxu0 0.0
    %946 = vmatpush.msra.mxu0 0.0
    %947 = vmatpush.msra.mxu0 0.0
    %948 = vmatpush.msra.mxu0 0.0
    %949 = vmatpush.msra.mxu0 0.0
    %950 = vmatpush.msra.mxu0 0.0
    %951 = vmatpush.msra.mxu0 0.0
    %952 = vmatpush.msra.mxu0 0.0
    %953 = vmatpush.msra.mxu0 1.0
    %954 = vmatpush.msra.mxu0 1.0
    %955 = vmatmul.f32.gmra.mxu0 %v937
    %v956 = vpop.f32.mrf.mxu0
    %v957 = vadd.f32 0.0, %v956
    %958 = vdwg.mxu0
    %v959 = vmul.f32 %v957, 0.0625
    %v960 = vadd.f32 %v959, 1e-05
    %v961 = vrsqrt.pop %v960
    %v962 = vmul.f32 %v961, %v960
    %v963 = vmul.f32 %v962, %v961
    %v964 = vmul.f32 0.5, %v963
    %v965 = vsub.f32 1.5, %v964
    %v966 = vmul.f32 %v961, %v965
    %vm967 = vweird.f32 %v960
    %vm968 = vweird.f32 %v961
    %vm969 = vmor %vm967, %vm968
    %v970 = vsel %vm969, %v961, %v966
    %972 = vset.pattern.permute.xlu0 0
    %973 = vperm.xlu0 %972, %v970
    %v974 = vpop.permute.xlu0 %973
    %v976 = vmul.f32 %v934, %v974
    %v977 = vld [vmem:[%s59] sm:$0x1]
    %v979 = vperm.slane %v977, 0
    %v981 = vmul.f32 %v976, %v979
    %v982 = vld [vmem:[%s61] sm:$0x1]
    %v984 = vperm.slane %v982, 0
    %v986 = vadd.f32 %v981, %v984
    %v987 = vmax.f32 %v986, 0.0
    %v988 = vld [vmem:[%s63] sm:$0xff]
    %v989 = vld [vmem:[%s63 + $0x8] sm:$0xf]
    %v990 = vld [vmem:[%s65] sm:$0x1]
    %v992 = vperm.slane %v990, 0
    %v995 = vsel %vm881, %v989, 0
    %997 = vmatpush.msra.mxu0 0.0
    %998 = vmatpush.msra.mxu0 0.0
    %999 = vmatpush.msra.mxu0 0.0
    %1000 = vmatpush.msra.mxu0 0.0
    %1001 = vmatpush.msra.mxu0 0.0
    %1002 = vmatpush.msra.mxu0 0.0
    %1003 = vmatpush.msra.mxu0 0.0
    %1004 = vmatpush.msra.mxu0 0.0
    %1005 = vmatpush.msra.mxu0 0.0
    %1006 = vmatpush.msra.mxu0 0.0
    %1007 = vmatpush.msra.mxu0 0.0
    %1008 = vmatpush.msra.mxu0 0.0
    %1009 = vmatpush.msra.mxu0 0.0
    %1010 = vmatpush.msra.mxu0 0.0
    %1011 = vmatpush.msra.mxu0 %v995
    %1012 = vmatpush.msra.mxu0 %v988
    %1013 = vmatmul.f32.gmra.mxu0 %v879
    %v1014 = vpop.f32.mrf.mxu0
    %v1015 = vadd.f32 %v992, %v1014
    %1016 = vdwg.mxu0
    %v1018 = vsel %vm224, %v1015, 0
    %1020 = vmatpush.msra.mxu0 0.0
    %1021 = vmatpush.msra.mxu0 0.0
    %1022 = vmatpush.msra.mxu0 0.0
    %1023 = vmatpush.msra.mxu0 0.0
    %1024 = vmatpush.msra.mxu0 0.0
    %1025 = vmatpush.msra.mxu0 0.0
    %1026 = vmatpush.msra.mxu0 0.0
    %1027 = vmatpush.msra.mxu0 0.0
    %1028 = vmatpush.msra.mxu0 0.0
    %1029 = vmatpush.msra.mxu0 0.0
    %1030 = vmatpush.msra.mxu0 0.0
    %1031 = vmatpush.msra.mxu0 0.0
    %1032 = vmatpush.msra.mxu0 1.0
    %1033 = vmatpush.msra.mxu0 1.0
    %1034 = vmatpush.msra.mxu0 1.0
    %1035 = vmatpush.msra.mxu0 1.0
    %1036 = vmatmul.f32.gmra.mxu0 %v1018
    %v1037 = vpop.f32.mrf.mxu0
    %v1038 = vadd.f32 0.0, %v1037
    %1039 = vdwg.mxu0
    %v1040 = vmul.f32 %v1038, 0.03125
    %1042 = vset.pattern.permute.xlu0 0
    %1043 = vperm.xlu0 %1042, %v1040
    %v1044 = vpop.permute.xlu0 %1043
    %v1046 = vsub.f32 %v1015, %v1044
    %v1047 = vmul.f32 %v1046, %v1046
    %v1049 = vsel %vm224, %v1047, 0
    %1051 = vmatpush.msra.mxu0 0.0
    %1052 = vmatpush.msra.mxu0 0.0
    %1053 = vmatpush.msra.mxu0 0.0
    %1054 = vmatpush.msra.mxu0 0.0
    %1055 = vmatpush.msra.mxu0 0.0
    %1056 = vmatpush.msra.mxu0 0.0
    %1057 = vmatpush.msra.mxu0 0.0
    %1058 = vmatpush.msra.mxu0 0.0
    %1059 = vmatpush.msra.mxu0 0.0
    %1060 = vmatpush.msra.mxu0 0.0
    %1061 = vmatpush.msra.mxu0 0.0
    %1062 = vmatpush.msra.mxu0 0.0
    %1063 = vmatpush.msra.mxu0 1.0
    %1064 = vmatpush.msra.mxu0 1.0
    %1065 = vmatpush.msra.mxu0 1.0
    %1066 = vmatpush.msra.mxu0 1.0
    %1067 = vmatmul.f32.gmra.mxu0 %v1049
    %v1068 = vpop.f32.mrf.mxu0
    %v1069 = vadd.f32 0.0, %v1068
    %1070 = vdwg.mxu0
    %v1071 = vmul.f32 %v1069, 0.03125
    %v1072 = vadd.f32 %v1071, 1e-05
    %v1073 = vrsqrt.pop %v1072
    %v1074 = vmul.f32 %v1073, %v1072
    %v1075 = vmul.f32 %v1074, %v1073
    %v1076 = vmul.f32 0.5, %v1075
    %v1077 = vsub.f32 1.5, %v1076
    %v1078 = vmul.f32 %v1073, %v1077
    %vm1079 = vweird.f32 %v1072
    %vm1080 = vweird.f32 %v1073
    %vm1081 = vmor %vm1079, %vm1080
    %v1082 = vsel %vm1081, %v1073, %v1078
    %1084 = vset.pattern.permute.xlu0 0
    %1085 = vperm.xlu0 %1084, %v1082
    %v1086 = vpop.permute.xlu0 %1085
    %v1088 = vmul.f32 %v1046, %v1086
    %v1089 = vld [vmem:[%s67] sm:$0x1]
    %v1091 = vperm.slane %v1089, 0
    %v1093 = vmul.f32 %v1088, %v1091
    %v1094 = vld [vmem:[%s69] sm:$0x1]
    %v1096 = vperm.slane %v1094, 0
    %v1098 = vadd.f32 %v1093, %v1096
    %v1099 = vmax.f32 %v1098, 0.0
    %v1100 = vmul.f32 %v421, %v644
    %v1101 = vld [vmem:[%s71] sm:$0xff]
    %v1102 = vld [vmem:[%s71 + $0x8] sm:$0xff]
    %v1103 = vld [vmem:[%s73] sm:$0x1]
    %v1105 = vperm.slane %v1103, 0
    %v1108 = vsel %vm200, %v1100, 0
    %1110 = vmatpush.msra.mxu0 0.0
    %1111 = vmatpush.msra.mxu0 0.0
    %1112 = vmatpush.msra.mxu0 0.0
    %1113 = vmatpush.msra.mxu0 0.0
    %1114 = vmatpush.msra.mxu0 0.0
    %1115 = vmatpush.msra.mxu0 0.0
    %1116 = vmatpush.msra.mxu0 0.0
    %1117 = vmatpush.msra.mxu0 0.0
    %1118 = vmatpush.msra.mxu0 0.0
    %1119 = vmatpush.msra.mxu0 0.0
    %1120 = vmatpush.msra.mxu0 0.0
    %1121 = vmatpush.msra.mxu0 0.0
    %1122 = vmatpush.msra.mxu0 0.0
    %1123 = vmatpush.msra.mxu0 0.0
    %1124 = vmatpush.msra.mxu0 %v1102
    %1125 = vmatpush.msra.mxu0 %v1101
    %1126 = vmatmul.f32.gmra.mxu0 %v1108
    %v1127 = vpop.f32.mrf.mxu0
    %v1128 = vadd.f32 %v1105, %v1127
    %1129 = vdwg.mxu0
    %v1131 = vsel %vm224, %v1128, 0
    %1133 = vmatpush.msra.mxu0 0.0
    %1134 = vmatpush.msra.mxu0 0.0
    %1135 = vmatpush.msra.mxu0 0.0
    %1136 = vmatpush.msra.mxu0 0.0
    %1137 = vmatpush.msra.mxu0 0.0
    %1138 = vmatpush.msra.mxu0 0.0
    %1139 = vmatpush.msra.mxu0 0.0
    %1140 = vmatpush.msra.mxu0 0.0
    %1141 = vmatpush.msra.mxu0 0.0
    %1142 = vmatpush.msra.mxu0 0.0
    %1143 = vmatpush.msra.mxu0 0.0
    %1144 = vmatpush.msra.mxu0 0.0
    %1145 = vmatpush.msra.mxu0 1.0
    %1146 = vmatpush.msra.mxu0 1.0
    %1147 = vmatpush.msra.mxu0 1.0
    %1148 = vmatpush.msra.mxu0 1.0
    %1149 = vmatmul.f32.gmra.mxu0 %v1131
    %v1150 = vpop.f32.mrf.mxu0
    %v1151 = vadd.f32 0.0, %v1150
    %1152 = vdwg.mxu0
    %v1153 = vmul.f32 %v1151, 0.03125
    %1155 = vset.pattern.permute.xlu0 0
    %1156 = vperm.xlu0 %1155, %v1153
    %v1157 = vpop.permute.xlu0 %1156
    %v1159 = vsub.f32 %v1128, %v1157
    %v1160 = vmul.f32 %v1159, %v1159
    %v1162 = vsel %vm224, %v1160, 0
    %1164 = vmatpush.msra.mxu0 0.0
    %1165 = vmatpush.msra.mxu0 0.0
    %1166 = vmatpush.msra.mxu0 0.0
    %1167 = vmatpush.msra.mxu0 0.0
    %1168 = vmatpush.msra.mxu0 0.0
    %1169 = vmatpush.msra.mxu0 0.0
    %1170 = vmatpush.msra.mxu0 0.0
    %1171 = vmatpush.msra.mxu0 0.0
    %1172 = vmatpush.msra.mxu0 0.0
    %1173 = vmatpush.msra.mxu0 0.0
    %1174 = vmatpush.msra.mxu0 0.0
    %1175 = vmatpush.msra.mxu0 0.0
    %1176 = vmatpush.msra.mxu0 1.0
    %1177 = vmatpush.msra.mxu0 1.0
    %1178 = vmatpush.msra.mxu0 1.0
    %1179 = vmatpush.msra.mxu0 1.0
    %1180 = vmatmul.f32.gmra.mxu0 %v1162
    %v1181 = vpop.f32.mrf.mxu0
    %v1182 = vadd.f32 0.0, %v1181
    %1183 = vdwg.mxu0
    %v1184 = vmul.f32 %v1182, 0.03125
    %v1185 = vadd.f32 %v1184, 1e-05
    %v1186 = vrsqrt.pop %v1185
    %v1187 = vmul.f32 %v1186, %v1185
    %v1188 = vmul.f32 %v1187, %v1186
    %v1189 = vmul.f32 0.5, %v1188
    %v1190 = vsub.f32 1.5, %v1189
    %v1191 = vmul.f32 %v1186, %v1190
    %vm1192 = vweird.f32 %v1185
    %vm1193 = vweird.f32 %v1186
    %vm1194 = vmor %vm1192, %vm1193
    %v1195 = vsel %vm1194, %v1186, %v1191
    %1197 = vset.pattern.permute.xlu0 0
    %1198 = vperm.xlu0 %1197, %v1195
    %v1199 = vpop.permute.xlu0 %1198
    %v1201 = vmul.f32 %v1159, %v1199
    %v1202 = vld [vmem:[%s75] sm:$0x1]
    %v1204 = vperm.slane %v1202, 0
    %v1206 = vmul.f32 %v1201, %v1204
    %v1207 = vld [vmem:[%s77] sm:$0x1]
    %v1209 = vperm.slane %v1207, 0
    %v1211 = vadd.f32 %v1206, %v1209
    %v1212 = vmax.f32 %v1211, 0.0
    %v1213 = vmul.f32 %v307, %v530
    %v1214 = vadd.f32 %v1212, %v1213
    %v1215 = vld [vmem:[%s79] sm:$0xff]
    %v1216 = vld [vmem:[%s79 + $0x8] sm:$0xff]
    %v1217 = vld [vmem:[%s79 + $0x10] sm:$0xff]
    %v1218 = vld [vmem:[%s79 + $0x18] sm:$0xff]
    %v1219 = vld [vmem:[#allocation2] sm:$0x1]
    %v1221 = vperm.slane %v1219, 0
    %v1224 = vsel %vm224, %v1214, 0
    %1226 = vmatpush.msra.mxu0 0.0
    %1227 = vmatpush.msra.mxu0 0.0
    %1228 = vmatpush.msra.mxu0 0.0
    %1229 = vmatpush.msra.mxu0 0.0
    %1230 = vmatpush.msra.mxu0 0.0
    %1231 = vmatpush.msra.mxu0 0.0
    %1232 = vmatpush.msra.mxu0 0.0
    %1233 = vmatpush.msra.mxu0 0.0
    %1234 = vmatpush.msra.mxu0 0.0
    %1235 = vmatpush.msra.mxu0 0.0
    %1236 = vmatpush.msra.mxu0 0.0
    %1237 = vmatpush.msra.mxu0 0.0
    %1238 = vmatpush.msra.mxu0 %v1218
    %1239 = vmatpush.msra.mxu0 %v1217
    %1240 = vmatpush.msra.mxu0 %v1216
    %1241 = vmatpush.msra.mxu0 %v1215
    %1242 = vmatmul.f32.gmra.mxu0 %v1224
    %v1243 = vpop.f32.mrf.mxu0
    %v1244 = vadd.f32 %v1221, %v1243
    %1245 = vdwg.mxu0
    %v1246 = vmul.f32 %v758, %v987
    %v1248 = vsel %vm200, %v1246, 0
    %1250 = vmatpush.msra.mxu0 0.0
    %1251 = vmatpush.msra.mxu0 0.0
    %1252 = vmatpush.msra.mxu0 0.0
    %1253 = vmatpush.msra.mxu0 0.0
    %1254 = vmatpush.msra.mxu0 0.0
    %1255 = vmatpush.msra.mxu0 0.0
    %1256 = vmatpush.msra.mxu0 0.0
    %1257 = vmatpush.msra.mxu0 0.0
    %1258 = vmatpush.msra.mxu0 0.0
    %1259 = vmatpush.msra.mxu0 0.0
    %1260 = vmatpush.msra.mxu0 0.0
    %1261 = vmatpush.msra.mxu0 0.0
    %1262 = vmatpush.msra.mxu0 0.0
    %1263 = vmatpush.msra.mxu0 0.0
    %1264 = vmatpush.msra.mxu0 %v1102
    %1265 = vmatpush.msra.mxu0 %v1101
    %1266 = vmatmul.f32.gmra.mxu0 %v1248
    %v1267 = vpop.f32.mrf.mxu0
    %v1268 = vadd.f32 %v1105, %v1267
    %1269 = vdwg.mxu0
    %v1271 = vsel %vm224, %v1268, 0
    %1273 = vmatpush.msra.mxu0 0.0
    %1274 = vmatpush.msra.mxu0 0.0
    %1275 = vmatpush.msra.mxu0 0.0
    %1276 = vmatpush.msra.mxu0 0.0
    %1277 = vmatpush.msra.mxu0 0.0
    %1278 = vmatpush.msra.mxu0 0.0
    %1279 = vmatpush.msra.mxu0 0.0
    %1280 = vmatpush.msra.mxu0 0.0
    %1281 = vmatpush.msra.mxu0 0.0
    %1282 = vmatpush.msra.mxu0 0.0
    %1283 = vmatpush.msra.mxu0 0.0
    %1284 = vmatpush.msra.mxu0 0.0
    %1285 = vmatpush.msra.mxu0 1.0
    %1286 = vmatpush.msra.mxu0 1.0
    %1287 = vmatpush.msra.mxu0 1.0
    %1288 = vmatpush.msra.mxu0 1.0
    %1289 = vmatmul.f32.gmra.mxu0 %v1271
    %v1290 = vpop.f32.mrf.mxu0
    %v1291 = vadd.f32 0.0, %v1290
    %1292 = vdwg.mxu0
    %v1293 = vmul.f32 %v1291, 0.03125
    %1295 = vset.pattern.permute.xlu0 0
    %1296 = vperm.xlu0 %1295, %v1293
    %v1297 = vpop.permute.xlu0 %1296
    %v1299 = vsub.f32 %v1268, %v1297
    %v1300 = vmul.f32 %v1299, %v1299
    %v1302 = vsel %vm224, %v1300, 0
    %1304 = vmatpush.msra.mxu0 0.0
    %1305 = vmatpush.msra.mxu0 0.0
    %1306 = vmatpush.msra.mxu0 0.0
    %1307 = vmatpush.msra.mxu0 0.0
    %1308 = vmatpush.msra.mxu0 0.0
    %1309 = vmatpush.msra.mxu0 0.0
    %1310 = vmatpush.msra.mxu0 0.0
    %1311 = vmatpush.msra.mxu0 0.0
    %1312 = vmatpush.msra.mxu0 0.0
    %1313 = vmatpush.msra.mxu0 0.0
    %1314 = vmatpush.msra.mxu0 0.0
    %1315 = vmatpush.msra.mxu0 0.0
    %1316 = vmatpush.msra.mxu0 1.0
    %1317 = vmatpush.msra.mxu0 1.0
    %1318 = vmatpush.msra.mxu0 1.0
    %1319 = vmatpush.msra.mxu0 1.0
    %1320 = vmatmul.f32.gmra.mxu0 %v1302
    %v1321 = vpop.f32.mrf.mxu0
    %v1322 = vadd.f32 0.0, %v1321
    %1323 = vdwg.mxu0
    %v1324 = vmul.f32 %v1322, 0.03125
    %v1325 = vadd.f32 %v1324, 1e-05
    %v1326 = vrsqrt.pop %v1325
    %v1327 = vmul.f32 %v1326, %v1325
    %v1328 = vmul.f32 %v1327, %v1326
    %v1329 = vmul.f32 0.5, %v1328
    %v1330 = vsub.f32 1.5, %v1329
    %v1331 = vmul.f32 %v1326, %v1330
    %vm1332 = vweird.f32 %v1325
    %vm1333 = vweird.f32 %v1326
    %vm1334 = vmor %vm1332, %vm1333
    %v1335 = vsel %vm1334, %v1326, %v1331
    %1337 = vset.pattern.permute.xlu0 0
    %1338 = vperm.xlu0 %1337, %v1335
    %v1339 = vpop.permute.xlu0 %1338
    %v1341 = vmul.f32 %v1299, %v1339
    %v1342 = vmul.f32 %v1341, %v1204
    %v1343 = vadd.f32 %v1342, %v1209
    %v1344 = vmax.f32 %v1343, 0.0
    %v1345 = vmul.f32 %v870, %v1099
    %v1346 = vadd.f32 %v1344, %v1345
    %v1348 = vsel %vm224, %v1346, 0
    %1350 = vmatpush.msra.mxu0 0.0
    %1351 = vmatpush.msra.mxu0 0.0
    %1352 = vmatpush.msra.mxu0 0.0
    %1353 = vmatpush.msra.mxu0 0.0
    %1354 = vmatpush.msra.mxu0 0.0
    %1355 = vmatpush.msra.mxu0 0.0
    %1356 = vmatpush.msra.mxu0 0.0
    %1357 = vmatpush.msra.mxu0 0.0
    %1358 = vmatpush.msra.mxu0 0.0
    %1359 = vmatpush.msra.mxu0 0.0
    %1360 = vmatpush.msra.mxu0 0.0
    %1361 = vmatpush.msra.mxu0 0.0
    %1362 = vmatpush.msra.mxu0 %v1218
    %1363 = vmatpush.msra.mxu0 %v1217
    %1364 = vmatpush.msra.mxu0 %v1216
    %1365 = vmatpush.msra.mxu0 %v1215
    %1366 = vmatmul.f32.gmra.mxu0 %v1348
    %v1367 = vpop.f32.mrf.mxu0
    %v1368 = vadd.f32 %v1221, %v1367
    %1369 = vdwg.mxu0
    %1371 = vrot.lane.b32.xlu0 %v421, 32
    %v1372 = vpop.permute.xlu0 %1371
    %1375 = vrot.lane.b32.xlu0 %v870, 48
    %v1376 = vpop.permute.xlu0 %1375
    %1378 = vrot.lane.b32.xlu0 %v758, 80
    %v1379 = vpop.permute.xlu0 %1378
    %1381 = vrot.lane.b32.xlu0 %v530, 96
    %v1382 = vpop.permute.xlu0 %1381
    %1385 = vrot.lane.b32.xlu0 %v1099, 16
    %v1386 = vpop.permute.xlu0 %1385
    %1389 = vrot.lane.b32.xlu0 %v987, 48
    %v1390 = vpop.permute.xlu0 %1389
    %v1392 = vsel %vm224, %v307, %v1372
    %vm1393 = vcmask 392192
    %v1394 = vsel %vm1393, %v1392, %v1376
    %vm1395 = vcmask 654336
    %v1396 = vsel %vm1395, %v1394, %v1379
    %vm1397 = vcmask 785408
    %v1398 = vsel %vm1397, %v1396, %v1382
    %v1399 = vsel %vm200, %v644, %v1386
    %v1400 = vsel %vm1393, %v1399, %v1390
    %vm1401 = vcmask 523264
    %v1402 = vsel %vm1401, %v1400, 0.0
    %1403 = vst [vmem:[#allocation5] sm:$0xff] %v1398
    %1404 = vst [vmem:[#allocation5 + $0x8] sm:$0xff] %v1402
    %1405 = vst.msk [vmem:[#allocation6] sm:$0xff] %vm200, %v1244
    %1406 = vst.msk [vmem:[#allocation8] sm:$0xff] %vm200, %v1368
    // Predicated region
    $region170: #{tpu_custom_call.1} parent=1 // pred_check
      _
    $region171: #{tpu_custom_call.1} parent=1 // pred_check_branch
      %1408 = sbr.rel (0) target = $region173
    $region172: #{tpu_custom_call.1} parent=1 // pred_region
      %1410 = vsyncadd [#allocation4], 0
      %s1412 = sshll.u32 [#allocation5], 4
      %s1413 = int_to_ptr.vmem [resolvable:$true] %s1412
      %s1414 = sshll.u32 %s83, 4
      %s1415 = int_to_ptr.hbm [resolvable:$true] %s1414
      %1417 = dma.vmem_to_hbm [thread:$0]  %s1413, 256, %s1415, [#allocation4]
    $region173: #{tpu_custom_call.1} parent=1 // pred_fallthru
      _
    // Predicated region
    $region174: #{tpu_custom_call.1} parent=1 // pred_check
      _
    $region175: #{tpu_custom_call.1} parent=1 // pred_check_branch
      %1419 = sbr.rel (0) target = $region177
    $region176: #{tpu_custom_call.1} parent=1 // pred_region
      %1421 = vsyncadd [#allocation7], 0
      %s1423 = sshll.u32 [#allocation6], 4
      %s1424 = int_to_ptr.vmem [resolvable:$true] %s1423
      %s1425 = sshll.u32 %s85, 4
      %s1426 = int_to_ptr.hbm [resolvable:$true] %s1425
      %1428 = dma.vmem_to_hbm [thread:$0]  %s1424, 128, %s1426, [#allocation7]
    $region177: #{tpu_custom_call.1} parent=1 // pred_fallthru
      _
    // Predicated region
    $region178: #{tpu_custom_call.1} parent=1 // pred_check
      _
    $region179: #{tpu_custom_call.1} parent=1 // pred_check_branch
      %1430 = sbr.rel (0) target = $region181
    $region180: #{tpu_custom_call.1} parent=1 // pred_region
      %1432 = vsyncadd [#allocation7], 0
      %s1434 = sshll.u32 [#allocation8], 4
      %s1435 = int_to_ptr.vmem [resolvable:$true] %s1434
      %s1436 = sshll.u32 %s87, 4
      %s1437 = int_to_ptr.hbm [resolvable:$true] %s1436
      %1439 = dma.vmem_to_hbm [thread:$0]  %s1435, 128, %s1437, [#allocation7]
    $region181: #{tpu_custom_call.1} parent=1 // pred_fallthru
      _
    // Predicated region
    $region182: #{tpu_custom_call.1} parent=1 // pred_check
      _
    $region183: #{tpu_custom_call.1} parent=1 // pred_check_branch
      %1441 = sbr.rel (0) target = $region185
    $region184: #{tpu_custom_call.1} parent=1 // pred_region
      %1443 = dma.done [#allocation4], 256
    $region185: #{tpu_custom_call.1} parent=1 // pred_fallthru
      _
    // Predicated region
    $region186: #{tpu_custom_call.1} parent=1 // pred_check
      _
    $region187: #{tpu_custom_call.1} parent=1 // pred_check_branch
      %1445 = sbr.rel (0) target = $region189
    $region188: #{tpu_custom_call.1} parent=1 // pred_region
      %1447 = dma.done [#allocation7], 128
    $region189: #{tpu_custom_call.1} parent=1 // pred_fallthru
      _
    // Predicated region
    $region190: #{tpu_custom_call.1} parent=1 // pred_check
      _
    $region191: #{tpu_custom_call.1} parent=1 // pred_check_branch
      %1449 = sbr.rel (0) target = $region193
    $region192: #{tpu_custom_call.1} parent=1 // pred_region
      %1451 = dma.done [#allocation7], 128
    $region193: #{tpu_custom_call.1} parent=1 // pred_fallthru
      _
    %1452 = vsyncpa [#allocation3], 1
    %1453 = vsyncpa [#allocation4], 1
    %1454 = vsyncpa [#allocation7], 1

</llo_original>
